<compile_context>
chip_gen: v7x
topology: tpu7x:2x2x1
jax: 0.10.0
libtpu: 0.0.40
codegen_flags: <defaults>
</compile_context>

<pallas_src>
import functools

import jax
import jax.numpy as jnp
from jax.experimental import pallas as pl
from jax.experimental.pallas import tpu as pltpu

EPS = 1e-5


def _glu_depthwise_kernel(x_ref, w1_ref, b1_ref, wd_ref, bd_ref,
                          y_ref, stats_ref, pad_scr,
                          *, T, TD, K, P, P_pad, chunk):
    """Per (channel-block, batch) tile: GLU -> depthwise conv -> partial BN stats."""
    # Zero only the halo slabs of the padded scratch (not the whole buffer).
    if P_pad > 0:
        pad_scr[0:P_pad, :] = jnp.zeros((P_pad, TD), jnp.float32)
        pad_scr[P_pad + T:P_pad + T + P_pad, :] = jnp.zeros((P_pad, TD), jnp.float32)

    # pointwise_conv1 (1x1 conv == matmul; fused [A|G] bf16 weight, f32 acc) + GLU,
    # chunked over time so the live vreg working set stays bounded. Results go
    # straight into the 8-aligned interior of the padded scratch.
    for c0 in range(0, T, chunk):
        csz = min(chunk, T - c0)
        ag = jnp.dot(x_ref[c0:c0 + csz, :], w1_ref[...],
                     preferred_element_type=jnp.float32) + b1_ref[...]
        a = ag[:, :TD]
        g = ag[:, TD:]
        pad_scr[P_pad + c0:P_pad + c0 + csz, :] = a * jax.nn.sigmoid(g)
    # TODO(synk): pad_mask (masked_fill) branch not implemented; forward is called with pad_mask=None.

    # Depthwise conv along time ('same' zero padding, groups == channels) plus
    # one-pass BatchNorm partial statistics (sum, sum of squares) in f32.
    ssum = jnp.zeros((1, TD), jnp.float32)
    ssq = jnp.zeros((1, TD), jnp.float32)
    for c0 in range(0, T, chunk):
        csz = min(chunk, T - c0)
        acc = jnp.zeros((csz, TD), jnp.float32)
        for k in range(K):  # static, unrolled over kernel taps
            s0 = P_pad - P + k + c0
            acc = acc + pad_scr[s0:s0 + csz, :] * wd_ref[k:k + 1, :]
        acc = acc + bd_ref[...]
        y_ref[c0:c0 + csz, :] = acc
        ssum = ssum + jnp.sum(acc, axis=0, keepdims=True)
        ssq = ssq + jnp.sum(acc * acc, axis=0, keepdims=True)
    stats_ref[...] = jnp.concatenate([ssum, ssq], axis=0)


def _norm_swish_pw2_kernel(y_ref, scale_ref, shift_ref, w2_ref, b2_ref, o_ref):
    """Per row tile: folded BatchNorm (scale/shift) -> Swish -> pointwise_conv2."""
    z = y_ref[...] * scale_ref[...] + shift_ref[...]     # BN in f32
    z = z * jax.nn.sigmoid(z)                            # Swish in f32
    out = jnp.dot(z.astype(jnp.bfloat16), w2_ref[...],
                  preferred_element_type=jnp.float32) + b2_ref[...]
    o_ref[...] = out.astype(o_ref.dtype)


def _pick_divisor(n, candidates=(512, 256, 128, 64, 32, 16, 8)):
    for c in candidates:
        if n % c == 0:
            return c
    return n


@functools.partial(jax.jit, static_argnames=("kernel_size",))
def conformer_convolution(x, params, kernel_size):
    B, T, D = x.shape
    K = kernel_size
    P = (K - 1) // 2
    P_pad = 0 if P == 0 else ((P + 7) // 8) * 8   # 8-aligned halo -> aligned interior writes
    w1a, b1a, w1b, b1b, wd, bd, gamma, beta, w2, b2 = params

    # Tiling: channels in lane-dense blocks (128 when possible), one batch element
    # per grid step, time chunked inside the kernel. Fits comfortably in the
    # 32 MiB scoped VMEM budget on v5e/v6e/v7x even at realistic Conformer sizes.
    TD = 128 if D % 128 == 0 else D
    ndb = D // TD
    chunk = T if T <= 512 else 256
    vmem_params = dict(vmem_limit_bytes=32 * 1024 * 1024)

    # Fused GLU weight: for channel-block dj the columns are [A_dj | G_dj] so a
    # single MXU matmul feeds both GLU halves (split at a 128-multiple boundary).
    w1f = jnp.concatenate([w1a.reshape(D, ndb, TD), w1b.reshape(D, ndb, TD)],
                          axis=2).reshape(D, ndb * 2 * TD).astype(jnp.bfloat16)
    b1f = jnp.concatenate([b1a.reshape(1, ndb, TD), b1b.reshape(1, ndb, TD)],
                          axis=2).reshape(1, ndb * 2 * TD)
    x_bf = x.astype(jnp.bfloat16)
    w2_bf = w2.astype(jnp.bfloat16)

    # ---- pass 1: GLU + depthwise conv + per-(batch, channel) partial BN stats ----
    kernel1 = functools.partial(_glu_depthwise_kernel, T=T, TD=TD, K=K, P=P,
                                P_pad=P_pad, chunk=chunk)
    y, stats = pl.pallas_call(
        kernel1,
        out_shape=(jax.ShapeDtypeStruct((B, T, D), jnp.float32),
                   jax.ShapeDtypeStruct((B, 2, D), jnp.float32)),
        grid=(ndb, B),
        in_specs=[
            pl.BlockSpec((None, T, D), lambda dj, b: (b, 0, 0)),   # x (full D for matmul)
            pl.BlockSpec((D, 2 * TD), lambda dj, b: (0, dj)),       # fused GLU weight (resident over b)
            pl.BlockSpec((1, 2 * TD), lambda dj, b: (0, dj)),
            pl.BlockSpec((K, TD), lambda dj, b: (0, dj)),           # depthwise weight
            pl.BlockSpec((1, TD), lambda dj, b: (0, dj)),
        ],
        out_specs=(
            pl.BlockSpec((None, T, TD), lambda dj, b: (b, 0, dj)),  # pre-norm activations
            pl.BlockSpec((None, 2, TD), lambda dj, b: (b, 0, dj)),  # [sum, sumsq] per channel
        ),
        scratch_shapes=[pltpu.VMEM((T + 2 * P_pad, TD), jnp.float32)],
        compiler_params=pltpu.CompilerParams(
            dimension_semantics=("parallel", "parallel"), **vmem_params),
    )(x_bf, w1f, b1f, wd, bd)

    # ---- tiny cross-batch stats reduction + fold BN affine into scale/shift ----
    s = jnp.sum(stats, axis=0)                                     # (2, D)
    count = B * T
    mean = s[0] / count
    var = jnp.maximum(s[1] / count - mean * mean, 0.0)             # biased (training-mode) variance
    inv = jax.lax.rsqrt(var + EPS)
    scale = gamma * inv                                            # (1, D)
    shift = beta - mean * scale                                    # (1, D)

    # ---- pass 2: normalize + Swish + pointwise_conv2, tiled over (B*T) rows ----
    y2 = y.reshape(B * T, D)
    TR = _pick_divisor(B * T)
    out = pl.pallas_call(
        _norm_swish_pw2_kernel,
        out_shape=jax.ShapeDtypeStruct((B * T, D), x.dtype),
        grid=(B * T // TR,),
        in_specs=[
            pl.BlockSpec((TR, D), lambda i: (i, 0)),
            pl.BlockSpec((1, D), lambda i: (0, 0)),
            pl.BlockSpec((1, D), lambda i: (0, 0)),
            pl.BlockSpec((D, D), lambda i: (0, 0)),
            pl.BlockSpec((1, D), lambda i: (0, 0)),
        ],
        out_specs=pl.BlockSpec((TR, D), lambda i: (i, 0)),
        compiler_params=pltpu.CompilerParams(
            dimension_semantics=("parallel",), **vmem_params),
    )(y2, scale, shift, w2_bf, b2)
    return out.reshape(B, T, D)


def make_params(key, d_model, kernel_size):
    """Deterministic synthetic parameters, mirroring the PyTorch module shapes."""
    D, K = d_model, kernel_size
    ks = jax.random.split(key, 6)
    # pointwise_conv1: weight (2D, D, 1), bias (2D,)
    w1 = jax.random.normal(ks[0], (2 * D, D), jnp.float32) * 0.1
    b1 = jax.random.normal(ks[1], (2 * D,), jnp.float32) * 0.05
    w1a = w1[:D].T                      # (D, D), acts as x @ w1a
    w1b = w1[D:].T                      # (D, D)
    b1a = b1[:D].reshape(1, D)
    b1b = b1[D:].reshape(1, D)
    # depthwise_conv: weight (D, 1, K), bias (D,)
    wd = (jax.random.normal(ks[2], (D, K), jnp.float32) * 0.1).T   # (K, D)
    bd = (jax.random.normal(ks[3], (D,), jnp.float32) * 0.05).reshape(1, D)
    # BatchNorm1d affine params (default init)
    gamma = jnp.ones((1, D), jnp.float32)
    beta = jnp.zeros((1, D), jnp.float32)
    # pointwise_conv2: weight (D, D, 1), bias (D,)
    w2 = (jax.random.normal(ks[4], (D, D), jnp.float32) * 0.1).T   # (D, D)
    b2 = (jax.random.normal(ks[5], (D,), jnp.float32) * 0.05).reshape(1, D)
    return (w1a, b1a, w1b, b1b, wd, bd, gamma, beta, w2, b2)


def reference(x, params, kernel_size):
    """Pure-JAX reference with matching math (bf16 matmuls, f32 everything else)."""
    w1a, b1a, w1b, b1b, wd, bd, gamma, beta, w2, b2 = params
    B, T, D = x.shape
    K = kernel_size
    P = (K - 1) // 2
    xb = x.astype(jnp.bfloat16)
    a = jnp.dot(xb, w1a.astype(jnp.bfloat16), preferred_element_type=jnp.float32) + b1a
    g = jnp.dot(xb, w1b.astype(jnp.bfloat16), preferred_element_type=jnp.float32) + b1b
    y = a * jax.nn.sigmoid(g)
    yp = jnp.pad(y, ((0, 0), (P, P), (0, 0)))
    acc = sum(yp[:, k:k + T, :] * wd[k] for k in range(K)) + bd
    mean = acc.mean(axis=(0, 1), keepdims=True)
    var = (acc * acc).mean(axis=(0, 1), keepdims=True) - mean * mean
    z = (acc - mean) * jax.lax.rsqrt(var + EPS) * gamma + beta
    z = z * jax.nn.sigmoid(z)
    out = jnp.dot(z.astype(jnp.bfloat16), w2.astype(jnp.bfloat16),
                  preferred_element_type=jnp.float32) + b2
    return out.astype(x.dtype)


if __name__ == "__main__":
    # Small but lane-dense config: D multiple of 128, T multiple of 8.
    B, T, D, K = 2, 64, 128, 5   # batch, seq, d_model, depthwise kernel size
    key = jax.random.PRNGKey(0)
    kx, kp = jax.random.split(key)
    x = jax.random.normal(kx, (B, T, D), jnp.float32)
    params = make_params(kp, D, K)

    out = conformer_convolution(x, params, K)
    out = jax.block_until_ready(out)

    ref = reference(x, params, K)
    assert out.shape == (B, T, D)
    err = jnp.max(jnp.abs(out - ref))
    assert jnp.allclose(out, ref, atol=2e-2, rtol=2e-2), f"max abs diff {err}"
    print("KERNEL_OK")
</pallas_src>

<mosaic_0001>
module attributes {stable_mosaic.version = 11 : i64} {
  func.func @_glu_depthwise_kernel(%arg0: i32, %arg1: i32, %arg2: memref<1x64x128xbf16, #tpu.memory_space<vmem>>, %arg3: memref<128x256xbf16, #tpu.memory_space<vmem>>, %arg4: memref<1x256xf32, #tpu.memory_space<vmem>>, %arg5: memref<5x128xf32, #tpu.memory_space<vmem>>, %arg6: memref<1x128xf32, #tpu.memory_space<vmem>>, %arg7: memref<1x64x128xf32, #tpu.memory_space<vmem>>, %arg8: memref<1x2x128xf32, #tpu.memory_space<vmem>>, %arg9: memref<80x128xf32, #tpu.memory_space<vmem>>) attributes {dimension_semantics = [#tpu.dimension_semantics<parallel>, #tpu.dimension_semantics<parallel>], iteration_bounds = array<i64: 1, 2>, scalar_prefetch = 0 : i64, scratch_operands = 1 : i64, tpu.core_type = #tpu.core_type<tc>, window_params = [{transform_indices = @transform_0, window_bounds = array<i64: 1, 64, 128>}, {transform_indices = @transform_1, window_bounds = array<i64: 128, 256>}, {transform_indices = @transform_2, window_bounds = array<i64: 1, 256>}, {transform_indices = @transform_3, window_bounds = array<i64: 5, 128>}, {transform_indices = @transform_4, window_bounds = array<i64: 1, 128>}, {transform_indices = @transform_5, window_bounds = array<i64: 1, 64, 128>}, {transform_indices = @transform_6, window_bounds = array<i64: 1, 2, 128>}]} {
    %cst = arith.constant 0.000000e+00 : f32
    %0 = vector.broadcast %cst : f32 to vector<8x128xf32>
    %c0 = arith.constant 0 : index
    %c0_0 = arith.constant 0 : index
    %1 = vector.load %arg9[%c0, %c0_0] : memref<80x128xf32, #tpu.memory_space<vmem>>, vector<8x128xf32>
    tpu.vector_store %arg9[%c0, %c0_0], %0 {strides = array<i32>} : memref<80x128xf32, #tpu.memory_space<vmem>>, vector<8x128xf32>,
    %cst_1 = arith.constant 0.000000e+00 : f32
    %2 = vector.broadcast %cst_1 : f32 to vector<8x128xf32>
    %c72 = arith.constant 72 : index
    %c0_2 = arith.constant 0 : index
    %3 = vector.load %arg9[%c72, %c0_2] : memref<80x128xf32, #tpu.memory_space<vmem>>, vector<8x128xf32>
    tpu.vector_store %arg9[%c72, %c0_2], %2 {strides = array<i32>} : memref<80x128xf32, #tpu.memory_space<vmem>>, vector<8x128xf32>,
    %c0_3 = arith.constant 0 : index
    %c0_4 = arith.constant 0 : index
    %c0_5 = arith.constant 0 : index
    %4 = vector.load %arg2[%c0_3, %c0_4, %c0_5] : memref<1x64x128xbf16, #tpu.memory_space<vmem>>, vector<1x64x128xbf16>
    %5 = vector.shape_cast %4 : vector<1x64x128xbf16> to vector<64x128xbf16>
    %c0_6 = arith.constant 0 : index
    %c0_7 = arith.constant 0 : index
    %6 = vector.load %arg3[%c0_6, %c0_7] : memref<128x256xbf16, #tpu.memory_space<vmem>>, vector<128x256xbf16>
    %cst_8 = arith.constant dense<0.000000e+00> : vector<64x256xf32>
    %7 = tpu.matmul %5, %6, %cst_8 {dimension_numbers = #tpu.dot_dimension_numbers<[1], [0], [0], [1], [0, 0, 1, 1], [], []>} : vector<64x128xbf16>, vector<128x256xbf16>, vector<64x256xf32> -> vector<64x256xf32>
    %c0_9 = arith.constant 0 : index
    %c0_10 = arith.constant 0 : index
    %8 = vector.load %arg4[%c0_9, %c0_10] : memref<1x256xf32, #tpu.memory_space<vmem>>, vector<1x256xf32>
    %9 = vector.broadcast %8 : vector<1x256xf32> to vector<64x256xf32>
    %10 = arith.addf %7, %9 : vector<64x256xf32>
    %11 = vector.extract_strided_slice %10 {offsets = [0, 0], sizes = [64, 128], strides = [1, 1]} : vector<64x256xf32> to vector<64x128xf32>
    %12 = vector.extract_strided_slice %10 {offsets = [0, 128], sizes = [64, 128], strides = [1, 1]} : vector<64x256xf32> to vector<64x128xf32>
    %13 = arith.negf %12 : vector<64x128xf32>
    %14 = math.exp %13 : vector<64x128xf32>
    %cst_11 = arith.constant 1.000000e+00 : f32
    %15 = vector.broadcast %cst_11 : f32 to vector<64x128xf32>
    %16 = arith.addf %15, %14 : vector<64x128xf32>
    %17 = arith.divf %15, %16 : vector<64x128xf32>
    %18 = arith.mulf %11, %17 : vector<64x128xf32>
    %c8 = arith.constant 8 : index
    %c0_12 = arith.constant 0 : index
    %19 = vector.load %arg9[%c8, %c0_12] : memref<80x128xf32, #tpu.memory_space<vmem>>, vector<64x128xf32>
    tpu.vector_store %arg9[%c8, %c0_12], %18 {strides = array<i32>} : memref<80x128xf32, #tpu.memory_space<vmem>>, vector<64x128xf32>,
    %cst_13 = arith.constant 0.000000e+00 : f32
    %20 = vector.broadcast %cst_13 : f32 to vector<1x128xf32>
    %cst_14 = arith.constant 0.000000e+00 : f32
    %21 = vector.broadcast %cst_14 : f32 to vector<1x128xf32>
    %cst_15 = arith.constant 0.000000e+00 : f32
    %22 = vector.broadcast %cst_15 : f32 to vector<64x128xf32>
    %c6 = arith.constant 6 : index
    %c0_16 = arith.constant 0 : index
    %23 = vector.load %arg9[%c6, %c0_16] : memref<80x128xf32, #tpu.memory_space<vmem>>, vector<64x128xf32>
    %c0_17 = arith.constant 0 : index
    %c0_18 = arith.constant 0 : index
    %24 = vector.load %arg5[%c0_17, %c0_18] : memref<5x128xf32, #tpu.memory_space<vmem>>, vector<1x128xf32>
    %25 = vector.broadcast %24 : vector<1x128xf32> to vector<64x128xf32>
    %26 = arith.mulf %23, %25 : vector<64x128xf32>
    %27 = arith.addf %22, %26 : vector<64x128xf32>
    %c7 = arith.constant 7 : index
    %c0_19 = arith.constant 0 : index
    %28 = vector.load %arg9[%c7, %c0_19] : memref<80x128xf32, #tpu.memory_space<vmem>>, vector<64x128xf32>
    %c1 = arith.constant 1 : index
    %c0_20 = arith.constant 0 : index
    %29 = vector.load %arg5[%c1, %c0_20] : memref<5x128xf32, #tpu.memory_space<vmem>>, vector<1x128xf32>
    %30 = vector.broadcast %29 : vector<1x128xf32> to vector<64x128xf32>
    %31 = arith.mulf %28, %30 : vector<64x128xf32>
    %32 = arith.addf %27, %31 : vector<64x128xf32>
    %c8_21 = arith.constant 8 : index
    %c0_22 = arith.constant 0 : index
    %33 = vector.load %arg9[%c8_21, %c0_22] : memref<80x128xf32, #tpu.memory_space<vmem>>, vector<64x128xf32>
    %c2 = arith.constant 2 : index
    %c0_23 = arith.constant 0 : index
    %34 = vector.load %arg5[%c2, %c0_23] : memref<5x128xf32, #tpu.memory_space<vmem>>, vector<1x128xf32>
    %35 = vector.broadcast %34 : vector<1x128xf32> to vector<64x128xf32>
    %36 = arith.mulf %33, %35 : vector<64x128xf32>
    %37 = arith.addf %32, %36 : vector<64x128xf32>
    %c9 = arith.constant 9 : index
    %c0_24 = arith.constant 0 : index
    %38 = vector.load %arg9[%c9, %c0_24] : memref<80x128xf32, #tpu.memory_space<vmem>>, vector<64x128xf32>
    %c3 = arith.constant 3 : index
    %c0_25 = arith.constant 0 : index
    %39 = vector.load %arg5[%c3, %c0_25] : memref<5x128xf32, #tpu.memory_space<vmem>>, vector<1x128xf32>
    %40 = vector.broadcast %39 : vector<1x128xf32> to vector<64x128xf32>
    %41 = arith.mulf %38, %40 : vector<64x128xf32>
    %42 = arith.addf %37, %41 : vector<64x128xf32>
    %c10 = arith.constant 10 : index
    %c0_26 = arith.constant 0 : index
    %43 = vector.load %arg9[%c10, %c0_26] : memref<80x128xf32, #tpu.memory_space<vmem>>, vector<64x128xf32>
    %c4 = arith.constant 4 : index
    %c0_27 = arith.constant 0 : index
    %44 = vector.load %arg5[%c4, %c0_27] : memref<5x128xf32, #tpu.memory_space<vmem>>, vector<1x128xf32>
    %45 = vector.broadcast %44 : vector<1x128xf32> to vector<64x128xf32>
    %46 = arith.mulf %43, %45 : vector<64x128xf32>
    %47 = arith.addf %42, %46 : vector<64x128xf32>
    %c0_28 = arith.constant 0 : index
    %c0_29 = arith.constant 0 : index
    %48 = vector.load %arg6[%c0_28, %c0_29] : memref<1x128xf32, #tpu.memory_space<vmem>>, vector<1x128xf32>
    %49 = vector.broadcast %48 : vector<1x128xf32> to vector<64x128xf32>
    %50 = arith.addf %47, %49 : vector<64x128xf32>
    %c0_30 = arith.constant 0 : index
    %c0_31 = arith.constant 0 : index
    %c0_32 = arith.constant 0 : index
    %51 = vector.load %arg7[%c0_30, %c0_31, %c0_32] : memref<1x64x128xf32, #tpu.memory_space<vmem>>, vector<1x64x128xf32>
    %52 = vector.shape_cast %51 : vector<1x64x128xf32> to vector<64x128xf32>
    %53 = vector.shape_cast %50 : vector<64x128xf32> to vector<1x64x128xf32>
    tpu.vector_store %arg7[%c0_30, %c0_31, %c0_32], %53 {strides = array<i32>} : memref<1x64x128xf32, #tpu.memory_space<vmem>>, vector<1x64x128xf32>,
    %cst_33 = arith.constant dense<0.000000e+00> : vector<128xf32>
    %54 = vector.multi_reduction <add>, %50, %cst_33 [0] : vector<64x128xf32> to vector<128xf32>
    %55 = vector.shape_cast %54 : vector<128xf32> to vector<1x128xf32>
    %56 = arith.addf %20, %55 : vector<1x128xf32>
    %57 = arith.mulf %50, %50 : vector<64x128xf32>
    %cst_34 = arith.constant dense<0.000000e+00> : vector<128xf32>
    %58 = vector.multi_reduction <add>, %57, %cst_34 [0] : vector<64x128xf32> to vector<128xf32>
    %59 = vector.shape_cast %58 : vector<128xf32> to vector<1x128xf32>
    %60 = arith.addf %21, %59 : vector<1x128xf32>
    %61 = tpu.concatenate %56, %60 in 0 : vector<1x128xf32>, vector<1x128xf32> -> vector<2x128xf32>
    %c0_35 = arith.constant 0 : index
    %c0_36 = arith.constant 0 : index
    %c0_37 = arith.constant 0 : index
    %62 = vector.load %arg8[%c0_35, %c0_36, %c0_37] : memref<1x2x128xf32, #tpu.memory_space<vmem>>, vector<1x2x128xf32>
    %63 = vector.shape_cast %62 : vector<1x2x128xf32> to vector<2x128xf32>
    %64 = vector.shape_cast %61 : vector<2x128xf32> to vector<1x2x128xf32>
    tpu.vector_store %arg8[%c0_35, %c0_36, %c0_37], %64 {strides = array<i32>} : memref<1x2x128xf32, #tpu.memory_space<vmem>>, vector<1x2x128xf32>,
    return
  }
  func.func @transform_0(%arg0: i32, %arg1: i32) -> (i32, i32, i32) {
    %c0_i32 = arith.constant 0 : i32
    %c0_i32_0 = arith.constant 0 : i32
    %c0_i32_1 = arith.constant 0 : i32
    return %arg1, %c0_i32, %c0_i32_0 : i32, i32, i32
  }
  func.func @transform_1(%arg0: i32, %arg1: i32) -> (i32, i32) {
    %c0_i32 = arith.constant 0 : i32
    %c0_i32_0 = arith.constant 0 : i32
    return %c0_i32, %arg0 : i32, i32
  }
  func.func @transform_2(%arg0: i32, %arg1: i32) -> (i32, i32) {
    %c0_i32 = arith.constant 0 : i32
    %c0_i32_0 = arith.constant 0 : i32
    return %c0_i32, %arg0 : i32, i32
  }
  func.func @transform_3(%arg0: i32, %arg1: i32) -> (i32, i32) {
    %c0_i32 = arith.constant 0 : i32
    %c0_i32_0 = arith.constant 0 : i32
    return %c0_i32, %arg0 : i32, i32
  }
  func.func @transform_4(%arg0: i32, %arg1: i32) -> (i32, i32) {
    %c0_i32 = arith.constant 0 : i32
    %c0_i32_0 = arith.constant 0 : i32
    return %c0_i32, %arg0 : i32, i32
  }
  func.func @transform_5(%arg0: i32, %arg1: i32) -> (i32, i32, i32) {
    %c0_i32 = arith.constant 0 : i32
    %c0_i32_0 = arith.constant 0 : i32
    return %arg1, %c0_i32, %arg0 : i32, i32, i32
  }
  func.func @transform_6(%arg0: i32, %arg1: i32) -> (i32, i32, i32) {
    %c0_i32 = arith.constant 0 : i32
    %c0_i32_0 = arith.constant 0 : i32
    return %arg1, %c0_i32, %arg0 : i32, i32, i32
  }
}

module attributes {stable_mosaic.version = 11 : i64} {
  func.func @_norm_swish_pw2_kernel(%arg0: i32, %arg1: memref<128x128xf32, #tpu.memory_space<vmem>>, %arg2: memref<1x128xf32, #tpu.memory_space<vmem>>, %arg3: memref<1x128xf32, #tpu.memory_space<vmem>>, %arg4: memref<128x128xbf16, #tpu.memory_space<vmem>>, %arg5: memref<1x128xf32, #tpu.memory_space<vmem>>, %arg6: memref<128x128xf32, #tpu.memory_space<vmem>>) attributes {dimension_semantics = [#tpu.dimension_semantics<parallel>], iteration_bounds = array<i64: 1>, scalar_prefetch = 0 : i64, scratch_operands = 0 : i64, tpu.core_type = #tpu.core_type<tc>, window_params = [{transform_indices = @transform_0, window_bounds = array<i64: 128, 128>}, {pipeline_mode = #tpu.pipeline_mode<synchronous>, transform_indices = @transform_1, window_bounds = array<i64: 1, 128>}, {pipeline_mode = #tpu.pipeline_mode<synchronous>, transform_indices = @transform_2, window_bounds = array<i64: 1, 128>}, {pipeline_mode = #tpu.pipeline_mode<synchronous>, transform_indices = @transform_3, window_bounds = array<i64: 128, 128>}, {pipeline_mode = #tpu.pipeline_mode<synchronous>, transform_indices = @transform_4, window_bounds = array<i64: 1, 128>}, {transform_indices = @transform_5, window_bounds = array<i64: 128, 128>}]} {
    %c0 = arith.constant 0 : index
    %c0_0 = arith.constant 0 : index
    %0 = vector.load %arg1[%c0, %c0_0] : memref<128x128xf32, #tpu.memory_space<vmem>>, vector<128x128xf32>
    %c0_1 = arith.constant 0 : index
    %c0_2 = arith.constant 0 : index
    %1 = vector.load %arg2[%c0_1, %c0_2] : memref<1x128xf32, #tpu.memory_space<vmem>>, vector<1x128xf32>
    %2 = vector.broadcast %1 : vector<1x128xf32> to vector<128x128xf32>
    %3 = arith.mulf %0, %2 : vector<128x128xf32>
    %c0_3 = arith.constant 0 : index
    %c0_4 = arith.constant 0 : index
    %4 = vector.load %arg3[%c0_3, %c0_4] : memref<1x128xf32, #tpu.memory_space<vmem>>, vector<1x128xf32>
    %5 = vector.broadcast %4 : vector<1x128xf32> to vector<128x128xf32>
    %6 = arith.addf %3, %5 : vector<128x128xf32>
    %7 = arith.negf %6 : vector<128x128xf32>
    %8 = math.exp %7 : vector<128x128xf32>
    %cst = arith.constant 1.000000e+00 : f32
    %9 = vector.broadcast %cst : f32 to vector<128x128xf32>
    %10 = arith.addf %9, %8 : vector<128x128xf32>
    %11 = arith.divf %9, %10 : vector<128x128xf32>
    %12 = arith.mulf %6, %11 : vector<128x128xf32>
    %13 = arith.truncf %12 : vector<128x128xf32> to vector<128x128xbf16>
    %c0_5 = arith.constant 0 : index
    %c0_6 = arith.constant 0 : index
    %14 = vector.load %arg4[%c0_5, %c0_6] : memref<128x128xbf16, #tpu.memory_space<vmem>>, vector<128x128xbf16>
    %cst_7 = arith.constant dense<0.000000e+00> : vector<128x128xf32>
    %15 = tpu.matmul %13, %14, %cst_7 {dimension_numbers = #tpu.dot_dimension_numbers<[1], [0], [0], [1], [0, 0, 1, 1], [], []>} : vector<128x128xbf16>, vector<128x128xbf16>, vector<128x128xf32> -> vector<128x128xf32>
    %c0_8 = arith.constant 0 : index
    %c0_9 = arith.constant 0 : index
    %16 = vector.load %arg5[%c0_8, %c0_9] : memref<1x128xf32, #tpu.memory_space<vmem>>, vector<1x128xf32>
    %17 = vector.broadcast %16 : vector<1x128xf32> to vector<128x128xf32>
    %18 = arith.addf %15, %17 : vector<128x128xf32>
    %c0_10 = arith.constant 0 : index
    %c0_11 = arith.constant 0 : index
    %19 = vector.load %arg6[%c0_10, %c0_11] : memref<128x128xf32, #tpu.memory_space<vmem>>, vector<128x128xf32>
    tpu.vector_store %arg6[%c0_10, %c0_11], %18 {strides = array<i32>} : memref<128x128xf32, #tpu.memory_space<vmem>>, vector<128x128xf32>,
    return
  }
  func.func @transform_0(%arg0: i32) -> (i32, i32) {
    %c0_i32 = arith.constant 0 : i32
    %c0_i32_0 = arith.constant 0 : i32
    return %arg0, %c0_i32 : i32, i32
  }
  func.func @transform_1(%arg0: i32) -> (i32, i32) {
    %c0_i32 = arith.constant 0 : i32
    %c0_i32_0 = arith.constant 0 : i32
    %c0_i32_1 = arith.constant 0 : i32
    return %c0_i32, %c0_i32_0 : i32, i32
  }
  func.func @transform_2(%arg0: i32) -> (i32, i32) {
    %c0_i32 = arith.constant 0 : i32
    %c0_i32_0 = arith.constant 0 : i32
    %c0_i32_1 = arith.constant 0 : i32
    return %c0_i32, %c0_i32_0 : i32, i32
  }
  func.func @transform_3(%arg0: i32) -> (i32, i32) {
    %c0_i32 = arith.constant 0 : i32
    %c0_i32_0 = arith.constant 0 : i32
    %c0_i32_1 = arith.constant 0 : i32
    return %c0_i32, %c0_i32_0 : i32, i32
  }
  func.func @transform_4(%arg0: i32) -> (i32, i32) {
    %c0_i32 = arith.constant 0 : i32
    %c0_i32_0 = arith.constant 0 : i32
    %c0_i32_1 = arith.constant 0 : i32
    return %c0_i32, %c0_i32_0 : i32, i32
  }
  func.func @transform_5(%arg0: i32) -> (i32, i32) {
    %c0_i32 = arith.constant 0 : i32
    %c0_i32_0 = arith.constant 0 : i32
    return %arg0, %c0_i32 : i32, i32
  }
}

</mosaic_0001>

<llo_original>
// kernel: conformer_convolution.3
$region0: #{conformer_convolution.3}
  #allocation0 [shape = 'u32[]', space=smem, size = 0x4, offset = 0x4, fixed_abs, tag = 'smem constant byte address 0x4 - core index']
  #allocation1 [shape = 'u32[144,128]{1,0:T(1,128)}', space=vmem, size = 0x12000, scoped, tag = 'internal scratch']
  %s0 = inlined_call_operand.vmem [shape: f32[128,128], index: 0, kind: input, shape index: {}]
  %s1 = inlined_call_operand.vmem [shape: f32[1,128], index: 1, kind: input, shape index: {}]
  %s2 = inlined_call_operand.vmem [shape: f32[1,128], index: 2, kind: input, shape index: {}]
  %s3 = inlined_call_operand.vmem [shape: bf16[128,128], index: 3, kind: input, shape index: {}]
  %s4 = inlined_call_operand.vmem [shape: f32[1,128], index: 4, kind: input, shape index: {}]
  %s5 = inlined_call_operand.hbm [shape: f32[128,128], index: 5, kind: output, shape index: {}]
  %s6 = sld [smem:[#allocation0]]
  $region30: #{conformer_convolution.3} parent=0
    _
  %s8 = ssub.s32 1, %s6
  %s9 = scalar_select 0, %s8, %s6
  $region1: #{conformer_convolution.3} parent=0
    #allocation2 [shape = 'u8[65536]{0}', space=vmem, size = 0x10000, scoped, tag = 'output window, operand 0, single buffered']
    #allocation3 [shape = 's32[1]{0}', space=sflag, size = 0x4, scoped, tag = 'scoped memory for conformer_convolution.3']
    %10 = vsyncpa [#allocation3], 0
    // Predicated region
    $region2: #{conformer_convolution.3} parent=1 // pred_check
      _
    $region3: #{conformer_convolution.3} parent=1 // pred_check_branch
      %12 = sbr.rel (0) target = $region5
    $region4: #{conformer_convolution.3} parent=1 // pred_region
      _
    $region5: #{conformer_convolution.3} parent=1 // pred_fallthru
      _
    // Predicated region
    $region6: #{conformer_convolution.3} parent=1 // pred_check
      _
    $region7: #{conformer_convolution.3} parent=1 // pred_check_branch
      %14 = sbr.rel (0) target = $region9
    $region8: #{conformer_convolution.3} parent=1 // pred_region
      _
    $region9: #{conformer_convolution.3} parent=1 // pred_fallthru
      _
    // Predicated region
    $region10: #{conformer_convolution.3} parent=1 // pred_check
      _
    $region11: #{conformer_convolution.3} parent=1 // pred_check_branch
      %16 = sbr.rel (0) target = $region13
    $region12: #{conformer_convolution.3} parent=1 // pred_region
      _
    $region13: #{conformer_convolution.3} parent=1 // pred_fallthru
      _
    // Predicated region
    $region14: #{conformer_convolution.3} parent=1 // pred_check
      _
    $region15: #{conformer_convolution.3} parent=1 // pred_check_branch
      %18 = sbr.rel (0) target = $region17
    $region16: #{conformer_convolution.3} parent=1 // pred_region
      _
    $region17: #{conformer_convolution.3} parent=1 // pred_fallthru
      _
    // Predicated region
    $region18: #{conformer_convolution.3} parent=1 // pred_check
      _
    $region19: #{conformer_convolution.3} parent=1 // pred_check_branch
      %20 = sbr.rel (0) target = $region21
    $region20: #{conformer_convolution.3} parent=1 // pred_region
      _
    $region21: #{conformer_convolution.3} parent=1 // pred_fallthru
      _
    %v22 = vld [vmem:[%s0] sm:$0xff]
    %v23 = vld [vmem:[%s0 + $0x8] sm:$0xff]
    %v24 = vld [vmem:[%s0 + $0x10] sm:$0xff]
    %v25 = vld [vmem:[%s0 + $0x18] sm:$0xff]
    %v26 = vld [vmem:[%s0 + $0x20] sm:$0xff]
    %v27 = vld [vmem:[%s0 + $0x28] sm:$0xff]
    %v28 = vld [vmem:[%s0 + $0x30] sm:$0xff]
    %v29 = vld [vmem:[%s0 + $0x38] sm:$0xff]
    %v30 = vld [vmem:[%s0 + $0x40] sm:$0xff]
    %v31 = vld [vmem:[%s0 + $0x48] sm:$0xff]
    %v32 = vld [vmem:[%s0 + $0x50] sm:$0xff]
    %v33 = vld [vmem:[%s0 + $0x58] sm:$0xff]
    %v34 = vld [vmem:[%s0 + $0x60] sm:$0xff]
    %v35 = vld [vmem:[%s0 + $0x68] sm:$0xff]
    %v36 = vld [vmem:[%s0 + $0x70] sm:$0xff]
    %v37 = vld [vmem:[%s0 + $0x78] sm:$0xff]
    %v38 = vld [vmem:[%s1] sm:$0x1]
    %v40 = vlaneseq
    %v41 = vshrl.u32 %v40, 7
    %v42 = vsub.s32 0, %v41
    %v43 = vrot.slane %v38, %v42
    %v45 = vmul.f32 %v22, %v43
    %v46 = vmul.f32 %v23, %v43
    %v47 = vmul.f32 %v24, %v43
    %v48 = vmul.f32 %v25, %v43
    %v49 = vmul.f32 %v26, %v43
    %v50 = vmul.f32 %v27, %v43
    %v51 = vmul.f32 %v28, %v43
    %v52 = vmul.f32 %v29, %v43
    %v53 = vmul.f32 %v30, %v43
    %v54 = vmul.f32 %v31, %v43
    %v55 = vmul.f32 %v32, %v43
    %v56 = vmul.f32 %v33, %v43
    %v57 = vmul.f32 %v34, %v43
    %v58 = vmul.f32 %v35, %v43
    %v59 = vmul.f32 %v36, %v43
    %v60 = vmul.f32 %v37, %v43
    %v61 = vld [vmem:[%s2] sm:$0x1]
    %v63 = vlaneseq
    %v64 = vshrl.u32 %v63, 7
    %v65 = vsub.s32 0, %v64
    %v66 = vrot.slane %v61, %v65
    %v68 = vadd.f32 %v45, %v66
    %v69 = vadd.f32 %v46, %v66
    %v70 = vadd.f32 %v47, %v66
    %v71 = vadd.f32 %v48, %v66
    %v72 = vadd.f32 %v49, %v66
    %v73 = vadd.f32 %v50, %v66
    %v74 = vadd.f32 %v51, %v66
    %v75 = vadd.f32 %v52, %v66
    %v76 = vadd.f32 %v53, %v66
    %v77 = vadd.f32 %v54, %v66
    %v78 = vadd.f32 %v55, %v66
    %v79 = vadd.f32 %v56, %v66
    %v80 = vadd.f32 %v57, %v66
    %v81 = vadd.f32 %v58, %v66
    %v82 = vadd.f32 %v59, %v66
    %v83 = vadd.f32 %v60, %v66
    %v84 = vxor.u32 %v68, 2147483648
    %v85 = vxor.u32 %v69, 2147483648
    %v86 = vxor.u32 %v70, 2147483648
    %v87 = vxor.u32 %v71, 2147483648
    %v88 = vxor.u32 %v72, 2147483648
    %v89 = vxor.u32 %v73, 2147483648
    %v90 = vxor.u32 %v74, 2147483648
    %v91 = vxor.u32 %v75, 2147483648
    %v92 = vxor.u32 %v76, 2147483648
    %v93 = vxor.u32 %v77, 2147483648
    %v94 = vxor.u32 %v78, 2147483648
    %v95 = vxor.u32 %v79, 2147483648
    %v96 = vxor.u32 %v80, 2147483648
    %v97 = vxor.u32 %v81, 2147483648
    %v98 = vxor.u32 %v82, 2147483648
    %v99 = vxor.u32 %v83, 2147483648
    %v100 = vmul.f32 %v84, 1.442695
    %v101 = vpow.pop %v100
    %v102 = vmul.f32 %v85, 1.442695
    %v103 = vpow.pop %v102
    %v104 = vmul.f32 %v86, 1.442695
    %v105 = vpow.pop %v104
    %v106 = vmul.f32 %v87, 1.442695
    %v107 = vpow.pop %v106
    %v108 = vmul.f32 %v88, 1.442695
    %v109 = vpow.pop %v108
    %v110 = vmul.f32 %v89, 1.442695
    %v111 = vpow.pop %v110
    %v112 = vmul.f32 %v90, 1.442695
    %v113 = vpow.pop %v112
    %v114 = vmul.f32 %v91, 1.442695
    %v115 = vpow.pop %v114
    %v116 = vmul.f32 %v92, 1.442695
    %v117 = vpow.pop %v116
    %v118 = vmul.f32 %v93, 1.442695
    %v119 = vpow.pop %v118
    %v120 = vmul.f32 %v94, 1.442695
    %v121 = vpow.pop %v120
    %v122 = vmul.f32 %v95, 1.442695
    %v123 = vpow.pop %v122
    %v124 = vmul.f32 %v96, 1.442695
    %v125 = vpow.pop %v124
    %v126 = vmul.f32 %v97, 1.442695
    %v127 = vpow.pop %v126
    %v128 = vmul.f32 %v98, 1.442695
    %v129 = vpow.pop %v128
    %v130 = vmul.f32 %v99, 1.442695
    %v131 = vpow.pop %v130
    %v132 = vadd.f32 %v101, 1.0
    %v133 = vadd.f32 %v103, 1.0
    %v134 = vadd.f32 %v105, 1.0
    %v135 = vadd.f32 %v107, 1.0
    %v136 = vadd.f32 %v109, 1.0
    %v137 = vadd.f32 %v111, 1.0
    %v138 = vadd.f32 %v113, 1.0
    %v139 = vadd.f32 %v115, 1.0
    %v140 = vadd.f32 %v117, 1.0
    %v141 = vadd.f32 %v119, 1.0
    %v142 = vadd.f32 %v121, 1.0
    %v143 = vadd.f32 %v123, 1.0
    %v144 = vadd.f32 %v125, 1.0
    %v145 = vadd.f32 %v127, 1.0
    %v146 = vadd.f32 %v129, 1.0
    %v147 = vadd.f32 %v131, 1.0
    %v148 = vrcp.pop %v132
    %v149 = vmul.f32 1.0, %v148
    %v150 = vrcp.pop %v133
    %v151 = vmul.f32 1.0, %v150
    %v152 = vrcp.pop %v134
    %v153 = vmul.f32 1.0, %v152
    %v154 = vrcp.pop %v135
    %v155 = vmul.f32 1.0, %v154
    %v156 = vrcp.pop %v136
    %v157 = vmul.f32 1.0, %v156
    %v158 = vrcp.pop %v137
    %v159 = vmul.f32 1.0, %v158
    %v160 = vrcp.pop %v138
    %v161 = vmul.f32 1.0, %v160
    %v162 = vrcp.pop %v139
    %v163 = vmul.f32 1.0, %v162
    %v164 = vrcp.pop %v140
    %v165 = vmul.f32 1.0, %v164
    %v166 = vrcp.pop %v141
    %v167 = vmul.f32 1.0, %v166
    %v168 = vrcp.pop %v142
    %v169 = vmul.f32 1.0, %v168
    %v170 = vrcp.pop %v143
    %v171 = vmul.f32 1.0, %v170
    %v172 = vrcp.pop %v144
    %v173 = vmul.f32 1.0, %v172
    %v174 = vrcp.pop %v145
    %v175 = vmul.f32 1.0, %v174
    %v176 = vrcp.pop %v146
    %v177 = vmul.f32 1.0, %v176
    %v178 = vrcp.pop %v147
    %v179 = vmul.f32 1.0, %v178
    %v180 = vmul.f32 %v68, %v149
    %v181 = vmul.f32 %v69, %v151
    %v182 = vmul.f32 %v70, %v153
    %v183 = vmul.f32 %v71, %v155
    %v184 = vmul.f32 %v72, %v157
    %v185 = vmul.f32 %v73, %v159
    %v186 = vmul.f32 %v74, %v161
    %v187 = vmul.f32 %v75, %v163
    %v188 = vmul.f32 %v76, %v165
    %v189 = vmul.f32 %v77, %v167
    %v190 = vmul.f32 %v78, %v169
    %v191 = vmul.f32 %v79, %v171
    %v192 = vmul.f32 %v80, %v173
    %v193 = vmul.f32 %v81, %v175
    %v194 = vmul.f32 %v82, %v177
    %v195 = vmul.f32 %v83, %v179
    %v196 = vpack.c.bf16 %v181, %v180
    %v197 = vpack.c.bf16 %v183, %v182
    %v198 = vpack.c.bf16 %v185, %v184
    %v199 = vpack.c.bf16 %v187, %v186
    %v200 = vpack.c.bf16 %v189, %v188
    %v201 = vpack.c.bf16 %v191, %v190
    %v202 = vpack.c.bf16 %v193, %v192
    %v203 = vpack.c.bf16 %v195, %v194
    %v204 = vld [vmem:[%s3] sm:$0xf]
    %v205 = vld [vmem:[%s3 + $0x4] sm:$0xf]
    %v206 = vld [vmem:[%s3 + $0x8] sm:$0xf]
    %v207 = vld [vmem:[%s3 + $0xc] sm:$0xf]
    %v208 = vld [vmem:[%s3 + $0x10] sm:$0xf]
    %v209 = vld [vmem:[%s3 + $0x14] sm:$0xf]
    %v210 = vld [vmem:[%s3 + $0x18] sm:$0xf]
    %v211 = vld [vmem:[%s3 + $0x1c] sm:$0xf]
    %v212 = vld [vmem:[%s3 + $0x20] sm:$0xf]
    %v213 = vld [vmem:[%s3 + $0x24] sm:$0xf]
    %v214 = vld [vmem:[%s3 + $0x28] sm:$0xf]
    %v215 = vld [vmem:[%s3 + $0x2c] sm:$0xf]
    %v216 = vld [vmem:[%s3 + $0x30] sm:$0xf]
    %v217 = vld [vmem:[%s3 + $0x34] sm:$0xf]
    %v218 = vld [vmem:[%s3 + $0x38] sm:$0xf]
    %v219 = vld [vmem:[%s3 + $0x3c] sm:$0xf]
    %v220 = vld [vmem:[%s4] sm:$0x1]
    %v222 = vlaneseq
    %v223 = vshrl.u32 %v222, 7
    %v224 = vsub.s32 0, %v223
    %v225 = vrot.slane %v220, %v224
    %v243 = vunpack.c.l.b16 %v204
    %v244 = vunpack.c.l.b16 %v205
    %v245 = vunpack.c.l.b16 %v206
    %v246 = vunpack.c.l.b16 %v207
    %v247 = vunpack.c.l.b16 %v208
    %v248 = vunpack.c.l.b16 %v209
    %v249 = vunpack.c.l.b16 %v210
    %v250 = vunpack.c.l.b16 %v211
    %v251 = vunpack.c.l.b16 %v212
    %v252 = vunpack.c.l.b16 %v213
    %v253 = vunpack.c.l.b16 %v214
    %v254 = vunpack.c.l.b16 %v215
    %v255 = vunpack.c.l.b16 %v216
    %v256 = vunpack.c.l.b16 %v217
    %v257 = vunpack.c.l.b16 %v218
    %v258 = vunpack.c.l.b16 %v219
    %v259 = vpack.c.b16 %v244, %v243
    %v260 = vpack.c.b16 %v246, %v245
    %v261 = vpack.c.b16 %v248, %v247
    %v262 = vpack.c.b16 %v250, %v249
    %v263 = vpack.c.b16 %v252, %v251
    %v264 = vpack.c.b16 %v254, %v253
    %v265 = vpack.c.b16 %v256, %v255
    %v266 = vpack.c.b16 %v258, %v257
    %275 = vmatprep.subr.bf16.mxu0 0
    %276 = vmatpush1.bf16.msra.mxu0 %v259
    %277 = vmatprep.subr.bf16.mxu0 0
    %278 = vmatpush1.bf16.msra.mxu0 %v260
    %279 = vmatprep.subr.bf16.mxu0 0
    %280 = vmatpush1.bf16.msra.mxu0 %v261
    %281 = vmatprep.subr.bf16.mxu0 0
    %282 = vmatpush1.bf16.msra.mxu0 %v262
    %283 = vmatprep.subr.bf16.mxu0 0
    %284 = vmatpush1.bf16.msra.mxu0 %v263
    %285 = vmatprep.subr.bf16.mxu0 0
    %286 = vmatpush1.bf16.msra.mxu0 %v264
    %287 = vmatprep.subr.bf16.mxu0 0
    %288 = vmatpush1.bf16.msra.mxu0 %v265
    %289 = vmatprep.subr.bf16.mxu0 0
    %290 = vmatpush1.bf16.msra.mxu0 %v266
    %291 = vmatprep.subr.bf16.mxu0 0
    %292 = vmatpush1.bf16.msra.mxu0 0
    %293 = vmatprep.subr.bf16.mxu0 0
    %294 = vmatpush1.bf16.msra.mxu0 0
    %295 = vmatprep.subr.bf16.mxu0 0
    %296 = vmatpush1.bf16.msra.mxu0 0
    %297 = vmatprep.subr.bf16.mxu0 0
    %298 = vmatpush1.bf16.msra.mxu0 0
    %299 = vmatprep.subr.bf16.mxu0 0
    %300 = vmatpush1.bf16.msra.mxu0 0
    %301 = vmatprep.subr.bf16.mxu0 0
    %302 = vmatpush1.bf16.msra.mxu0 0
    %303 = vmatprep.subr.bf16.mxu0 0
    %304 = vmatpush1.bf16.msra.mxu0 0
    %305 = vmatprep.subr.bf16.mxu0 0
    %306 = vmatpush1.bf16.msra.mxu0 0
    %307 = vmatprep.mubr.bf16.mxu0 0
    %308 = vmatmul.mubr.bf16.gmra.mrb[0].mxu0 %v196
    %v309 = vpop.f32.mrb[0].mxu0
    %v310 = vadd.f32 %v225, %v309
    %v311 = vpop.f32.mrb[0].mxu0
    %v312 = vpop.f32.mrb[0].mxu0
    %v313 = vadd.f32 %v225, %v312
    %v314 = vpop.f32.mrb[0].mxu0
    %315 = vmatprep.mubr.bf16.mxu0 0
    %316 = vmatmul.mubr.bf16.gmra.mrb[0].mxu0 %v197
    %v317 = vpop.f32.mrb[0].mxu0
    %v318 = vadd.f32 %v225, %v317
    %v319 = vpop.f32.mrb[0].mxu0
    %v320 = vpop.f32.mrb[0].mxu0
    %v321 = vadd.f32 %v225, %v320
    %v322 = vpop.f32.mrb[0].mxu0
    %323 = vmatprep.mubr.bf16.mxu0 0
    %324 = vmatmul.mubr.bf16.gmra.mrb[0].mxu0 %v198
    %v325 = vpop.f32.mrb[0].mxu0
    %v326 = vadd.f32 %v225, %v325
    %v327 = vpop.f32.mrb[0].mxu0
    %v328 = vpop.f32.mrb[0].mxu0
    %v329 = vadd.f32 %v225, %v328
    %v330 = vpop.f32.mrb[0].mxu0
    %331 = vmatprep.mubr.bf16.mxu0 0
    %332 = vmatmul.mubr.bf16.gmra.mrb[0].mxu0 %v199
    %v333 = vpop.f32.mrb[0].mxu0
    %v334 = vadd.f32 %v225, %v333
    %v335 = vpop.f32.mrb[0].mxu0
    %v336 = vpop.f32.mrb[0].mxu0
    %v337 = vadd.f32 %v225, %v336
    %v338 = vpop.f32.mrb[0].mxu0
    %339 = vmatprep.mubr.bf16.mxu0 0
    %340 = vmatmul.mubr.bf16.gmra.mrb[0].mxu0 %v200
    %v341 = vpop.f32.mrb[0].mxu0
    %v342 = vadd.f32 %v225, %v341
    %v343 = vpop.f32.mrb[0].mxu0
    %v344 = vpop.f32.mrb[0].mxu0
    %v345 = vadd.f32 %v225, %v344
    %v346 = vpop.f32.mrb[0].mxu0
    %347 = vmatprep.mubr.bf16.mxu0 0
    %348 = vmatmul.mubr.bf16.gmra.mrb[0].mxu0 %v201
    %v349 = vpop.f32.mrb[0].mxu0
    %v350 = vadd.f32 %v225, %v349
    %v351 = vpop.f32.mrb[0].mxu0
    %v352 = vpop.f32.mrb[0].mxu0
    %v353 = vadd.f32 %v225, %v352
    %v354 = vpop.f32.mrb[0].mxu0
    %355 = vmatprep.mubr.bf16.mxu0 0
    %356 = vmatmul.mubr.bf16.gmra.mrb[0].mxu0 %v202
    %v357 = vpop.f32.mrb[0].mxu0
    %v358 = vadd.f32 %v225, %v357
    %v359 = vpop.f32.mrb[0].mxu0
    %v360 = vpop.f32.mrb[0].mxu0
    %v361 = vadd.f32 %v225, %v360
    %v362 = vpop.f32.mrb[0].mxu0
    %363 = vmatprep.mubr.bf16.mxu0 0
    %364 = vmatmul.mubr.bf16.gmra.mrb[0].mxu0 %v203
    %v365 = vpop.f32.mrb[0].mxu0
    %v366 = vadd.f32 %v225, %v365
    %v367 = vpop.f32.mrb[0].mxu0
    %v368 = vpop.f32.mrb[0].mxu0
    %v369 = vadd.f32 %v225, %v368
    %v370 = vpop.f32.mrb[0].mxu0
    %371 = vdwg.mxu0
    %372 = vst [vmem:[#allocation2] sm:$0xff] %v310
    %373 = vst [vmem:[#allocation2 + $0x8] sm:$0xff] %v313
    %374 = vst [vmem:[#allocation2 + $0x10] sm:$0xff] %v318
    %375 = vst [vmem:[#allocation2 + $0x18] sm:$0xff] %v321
    %376 = vst [vmem:[#allocation2 + $0x20] sm:$0xff] %v326
    %377 = vst [vmem:[#allocation2 + $0x28] sm:$0xff] %v329
    %378 = vst [vmem:[#allocation2 + $0x30] sm:$0xff] %v334
    %379 = vst [vmem:[#allocation2 + $0x38] sm:$0xff] %v337
    %380 = vst [vmem:[#allocation2 + $0x40] sm:$0xff] %v342
    %381 = vst [vmem:[#allocation2 + $0x48] sm:$0xff] %v345
    %382 = vst [vmem:[#allocation2 + $0x50] sm:$0xff] %v350
    %383 = vst [vmem:[#allocation2 + $0x58] sm:$0xff] %v353
    %384 = vst [vmem:[#allocation2 + $0x60] sm:$0xff] %v358
    %385 = vst [vmem:[#allocation2 + $0x68] sm:$0xff] %v361
    %386 = vst [vmem:[#allocation2 + $0x70] sm:$0xff] %v366
    %387 = vst [vmem:[#allocation2 + $0x78] sm:$0xff] %v369
    // Predicated region
    $region22: #{conformer_convolution.3} parent=1 // pred_check
      _
    $region23: #{conformer_convolution.3} parent=1 // pred_check_branch
      %389 = sbr.rel (0) target = $region25
    $region24: #{conformer_convolution.3} parent=1 // pred_region
      %s391 = ssub.s32 2048, 2048
      %392 = vsyncadd [#allocation3], %s391
      %s393 = sshll.u32 [#allocation2], 4
      %s394 = int_to_ptr.vmem [resolvable:$true] %s393
      %399 = dma.vmem_to_hbm [thread:$0]  %s394, 2048, %s5, [#allocation3], 128, 128, 8
    $region25: #{conformer_convolution.3} parent=1 // pred_fallthru
      _
    // Predicated region
    $region26: #{conformer_convolution.3} parent=1 // pred_check
      _
    $region27: #{conformer_convolution.3} parent=1 // pred_check_branch
      %401 = sbr.rel (0) target = $region29
    $region28: #{conformer_convolution.3} parent=1 // pred_region
      %402 = dma.done [#allocation3], 2048
    $region29: #{conformer_convolution.3} parent=1 // pred_fallthru
      _
    %403 = vsyncpa [#allocation3], 1

// kernel: conformer_convolution.2
$region0: #{conformer_convolution.2}
  #allocation0 [shape = 'u32[]', space=smem, size = 0x4, offset = 0x4, fixed_abs, tag = 'smem constant byte address 0x4 - core index']
  #allocation1 [shape = 'u32[144,128]{1,0:T(1,128)}', space=vmem, size = 0x12000, scoped, tag = 'internal scratch']
  #allocation2 [shape = 'f32[80,128]{1,0:T(8,128)}', space=vmem, size = 0xa000, scoped, tag = 'scratch operand']
  %s0 = inlined_call_operand.vmem [shape: bf16[2,64,128], index: 0, kind: input, shape index: {}]
  %s1 = inlined_call_operand.vmem [shape: bf16[128,256], index: 1, kind: input, shape index: {}]
  %s2 = inlined_call_operand.vmem [shape: f32[1,256], index: 2, kind: input, shape index: {}]
  %s3 = inlined_call_operand.vmem [shape: f32[5,128], index: 3, kind: input, shape index: {}]
  %s4 = inlined_call_operand.vmem [shape: f32[1,128], index: 4, kind: input, shape index: {}]
  %s5 = inlined_call_operand.vmem [shape: f32[2,64,128], index: 5, kind: output, shape index: {0}]
  %s6 = inlined_call_operand.vmem [shape: f32[2,2,128], index: 6, kind: output, shape index: {1}]
  %7 = xla_tuple %s5, %s6
  %s8 = sld [smem:[#allocation0]]
  $region61: #{conformer_convolution.2} parent=0
    _
  %s10 = ssub.s32 1, %s8
  %s11 = scalar_select 0, %s10, %s8
  loop: start=0, step=1, limit=4
  $region2: #{conformer_convolution.2} parent=0 // loop_pre_header
    _
  $region3: #{conformer_convolution.2} parent=0 // loop_header
    %s13 = sphi 0, %s17
    %p14 = scmp.ge.s32.totalorder %s13, 4
    %s20 = sphi 0, %s32
    %s21 = sphi 0, %s28
    %s22 = sphi 0, %s20
    %s23 = sphi 0, %s21
    %s24 = sphi 0, %s22
    %s25 = sphi 0, %s23
    %s35 = sphi 0, %s37
    %s38 = sphi 0, %s35
    %s39 = sphi 0, %s38
    %s55 = sphi 0, %s39
    %s61 = sphi 0, %s63
    %s64 = sphi 0, %s61
    %s65 = sphi 0, %s64
    %s81 = sphi 0, %s65
    %s87 = sphi 0, %s89
    %s90 = sphi 0, %s87
    %s91 = sphi 0, %s90
    %s107 = sphi 0, %s91
    %s113 = sphi 0, %s115
    %s116 = sphi 0, %s113
    %s117 = sphi 0, %s116
    %s133 = sphi 0, %s117
    %s139 = sphi 0, %s141
    %s142 = sphi 0, %s139
    %s143 = sphi 0, %s142
    %s159 = sphi 0, %s143
    %s167 = sphi 0, %s169
    %s170 = sphi 0, %s167
    %s171 = sphi 0, %s170
    %s187 = sphi 0, %s171
    %s195 = sphi 0, %s197
    %s198 = sphi 0, %s195
    %s199 = sphi 0, %s198
    %s215 = sphi 0, %s199
  $region4: #{conformer_convolution.2} parent=0 // loop_header_branch
    %16 = sbr.rel (%p14) target = $region8
  $region5: #{conformer_convolution.2} parent=0 // loop_body
    %s18 = ssub.s32 %s13, 1
    %s19 = ssub.s32 %s13, 2
    %s26 = sadd.s32 1, %s21
    %p27 = scmp.ge.s32.totalorder %s26, 2
    %s28 = scalar_select %p27, 0, %s26
    %s29 = sadd.s32 1, %s20
    %s30 = scalar_select %p27, %s29, %s20
    %p31 = scmp.ge.s32.totalorder %s30, 1
    %s32 = scalar_select %p31, 0, %s30
    %s33 = ssub.s32 %s21, %s28
    %p34 = scmp.eq.s32.totalorder %s33, 0
    %s36 = sadd.s32 %s35, 1
    %s37 = scalar_select %p34, %s35, %s36
    %p40 = pneg %p34
    %p41 = scmp.eq.s32.totalorder %s13, 1
    %p42 = por %p40, %p41
    %p43 = scmp.ne.s32.totalorder %s35, %s38
    %p44 = scmp.eq.s32.totalorder %s13, 0
    %p45 = por %p43, %p44
    %p46 = scmp.ne.s32.totalorder %s35, %s38
    %p47 = scmp.eq.s32.totalorder %s18, 1
    %p48 = por %p46, %p47
    %p49 = scmp.ne.s32.totalorder %s38, %s39
    %p50 = scmp.eq.s32.totalorder %s18, 0
    %p51 = por %p49, %p50
    %p52 = scmp.ne.s32.totalorder %s38, %s39
    %p53 = scmp.eq.s32.totalorder %s19, 1
    %p54 = por %p52, %p53
    %p56 = scmp.ne.s32.totalorder %s39, %s55
    %p57 = scmp.eq.s32.totalorder %s19, 0
    %p58 = por %p56, %p57
    %s59 = ssub.s32 %s20, %s32
    %p60 = scmp.eq.s32.totalorder %s59, 0
    %s62 = sadd.s32 %s61, 1
    %s63 = scalar_select %p60, %s61, %s62
    %p66 = pneg %p60
    %p67 = scmp.eq.s32.totalorder %s13, 1
    %p68 = por %p66, %p67
    %p69 = scmp.ne.s32.totalorder %s61, %s64
    %p70 = scmp.eq.s32.totalorder %s13, 0
    %p71 = por %p69, %p70
    %p72 = scmp.ne.s32.totalorder %s61, %s64
    %p73 = scmp.eq.s32.totalorder %s18, 1
    %p74 = por %p72, %p73
    %p75 = scmp.ne.s32.totalorder %s64, %s65
    %p76 = scmp.eq.s32.totalorder %s18, 0
    %p77 = por %p75, %p76
    %p78 = scmp.ne.s32.totalorder %s64, %s65
    %p79 = scmp.eq.s32.totalorder %s19, 1
    %p80 = por %p78, %p79
    %p82 = scmp.ne.s32.totalorder %s65, %s81
    %p83 = scmp.eq.s32.totalorder %s19, 0
    %p84 = por %p82, %p83
    %s85 = ssub.s32 %s20, %s32
    %p86 = scmp.eq.s32.totalorder %s85, 0
    %s88 = sadd.s32 %s87, 1
    %s89 = scalar_select %p86, %s87, %s88
    %p92 = pneg %p86
    %p93 = scmp.eq.s32.totalorder %s13, 1
    %p94 = por %p92, %p93
    %p95 = scmp.ne.s32.totalorder %s87, %s90
    %p96 = scmp.eq.s32.totalorder %s13, 0
    %p97 = por %p95, %p96
    %p98 = scmp.ne.s32.totalorder %s87, %s90
    %p99 = scmp.eq.s32.totalorder %s18, 1
    %p100 = por %p98, %p99
    %p101 = scmp.ne.s32.totalorder %s90, %s91
    %p102 = scmp.eq.s32.totalorder %s18, 0
    %p103 = por %p101, %p102
    %p104 = scmp.ne.s32.totalorder %s90, %s91
    %p105 = scmp.eq.s32.totalorder %s19, 1
    %p106 = por %p104, %p105
    %p108 = scmp.ne.s32.totalorder %s91, %s107
    %p109 = scmp.eq.s32.totalorder %s19, 0
    %p110 = por %p108, %p109
    %s111 = ssub.s32 %s20, %s32
    %p112 = scmp.eq.s32.totalorder %s111, 0
    %s114 = sadd.s32 %s113, 1
    %s115 = scalar_select %p112, %s113, %s114
    %p118 = pneg %p112
    %p119 = scmp.eq.s32.totalorder %s13, 1
    %p120 = por %p118, %p119
    %p121 = scmp.ne.s32.totalorder %s113, %s116
    %p122 = scmp.eq.s32.totalorder %s13, 0
    %p123 = por %p121, %p122
    %p124 = scmp.ne.s32.totalorder %s113, %s116
    %p125 = scmp.eq.s32.totalorder %s18, 1
    %p126 = por %p124, %p125
    %p127 = scmp.ne.s32.totalorder %s116, %s117
    %p128 = scmp.eq.s32.totalorder %s18, 0
    %p129 = por %p127, %p128
    %p130 = scmp.ne.s32.totalorder %s116, %s117
    %p131 = scmp.eq.s32.totalorder %s19, 1
    %p132 = por %p130, %p131
    %p134 = scmp.ne.s32.totalorder %s117, %s133
    %p135 = scmp.eq.s32.totalorder %s19, 0
    %p136 = por %p134, %p135
    %s137 = ssub.s32 %s20, %s32
    %p138 = scmp.eq.s32.totalorder %s137, 0
    %s140 = sadd.s32 %s139, 1
    %s141 = scalar_select %p138, %s139, %s140
    %p144 = pneg %p138
    %p145 = scmp.eq.s32.totalorder %s13, 1
    %p146 = por %p144, %p145
    %p147 = scmp.ne.s32.totalorder %s139, %s142
    %p148 = scmp.eq.s32.totalorder %s13, 0
    %p149 = por %p147, %p148
    %p150 = scmp.ne.s32.totalorder %s139, %s142
    %p151 = scmp.eq.s32.totalorder %s18, 1
    %p152 = por %p150, %p151
    %p153 = scmp.ne.s32.totalorder %s142, %s143
    %p154 = scmp.eq.s32.totalorder %s18, 0
    %p155 = por %p153, %p154
    %p156 = scmp.ne.s32.totalorder %s142, %s143
    %p157 = scmp.eq.s32.totalorder %s19, 1
    %p158 = por %p156, %p157
    %p160 = scmp.ne.s32.totalorder %s143, %s159
    %p161 = scmp.eq.s32.totalorder %s19, 0
    %p162 = por %p160, %p161
    %s163 = ssub.s32 %s21, %s28
    %s164 = ssub.s32 %s20, %s32
    %s165 = sor.u32 %s163, %s164
    %p166 = scmp.eq.s32.totalorder %s165, 0
    %s168 = sadd.s32 %s167, 1
    %s169 = scalar_select %p166, %s167, %s168
    %p172 = pneg %p166
    %p173 = scmp.eq.s32.totalorder %s13, 1
    %p174 = por %p172, %p173
    %p175 = scmp.ne.s32.totalorder %s167, %s170
    %p176 = scmp.eq.s32.totalorder %s13, 0
    %p177 = por %p175, %p176
    %p178 = scmp.ne.s32.totalorder %s167, %s170
    %p179 = scmp.eq.s32.totalorder %s18, 1
    %p180 = por %p178, %p179
    %p181 = scmp.ne.s32.totalorder %s170, %s171
    %p182 = scmp.eq.s32.totalorder %s18, 0
    %p183 = por %p181, %p182
    %p184 = scmp.ne.s32.totalorder %s170, %s171
    %p185 = scmp.eq.s32.totalorder %s19, 1
    %p186 = por %p184, %p185
    %p188 = scmp.ne.s32.totalorder %s171, %s187
    %p189 = scmp.eq.s32.totalorder %s19, 0
    %p190 = por %p188, %p189
    %s191 = ssub.s32 %s21, %s28
    %s192 = ssub.s32 %s20, %s32
    %s193 = sor.u32 %s191, %s192
    %p194 = scmp.eq.s32.totalorder %s193, 0
    %s196 = sadd.s32 %s195, 1
    %s197 = scalar_select %p194, %s195, %s196
    %p200 = pneg %p194
    %p201 = scmp.eq.s32.totalorder %s13, 1
    %p202 = por %p200, %p201
    %p203 = scmp.ne.s32.totalorder %s195, %s198
    %p204 = scmp.eq.s32.totalorder %s13, 0
    %p205 = por %p203, %p204
    %p206 = scmp.ne.s32.totalorder %s195, %s198
    %p207 = scmp.eq.s32.totalorder %s18, 1
    %p208 = por %p206, %p207
    %p209 = scmp.ne.s32.totalorder %s198, %s199
    %p210 = scmp.eq.s32.totalorder %s18, 0
    %p211 = por %p209, %p210
    %p212 = scmp.ne.s32.totalorder %s198, %s199
    %p213 = scmp.eq.s32.totalorder %s19, 1
    %p214 = por %p212, %p213
    %p216 = scmp.ne.s32.totalorder %s199, %s215
    %p217 = scmp.eq.s32.totalorder %s19, 0
    %p218 = por %p216, %p217
    %p219 = scmp.le.s32.totalorder 1, %s13
    %p220 = scmp.lt.s32.totalorder %s13, 3
    %p221 = pnand %p219, %p220
    %p222 = pneg %p221
    // Predicated region
    $region9: #{conformer_convolution.2} parent=5 // pred_check
      _
    $region10: #{conformer_convolution.2} parent=5 // pred_check_branch
      %224 = sbr.rel (%p221) target = $region12
    $region11: #{conformer_convolution.2} parent=5 // pred_region
      %s225 = ssub.s32 %s13, 1
      // Predicated region
      $region13: #{conformer_convolution.2} parent=11 // pred_check
        %p226 = pneg %p77
      $region14: #{conformer_convolution.2} parent=11 // pred_check_branch
        %228 = sbr.rel (%p226) target = $region16
      $region15: #{conformer_convolution.2} parent=11 // pred_region
        %s229 = smul.u32 2, %s22
        %p230 = scmp.lt.s32.totalorder %s229, 1
        %s231 = scalar_select %p230, %s229, 1
        %s232 = smul.addr %s231, 4
        %s233 = scalar_lea.vmem %s1, %s232
        %s234 = smul.u32 2, %s22
      $region16: #{conformer_convolution.2} parent=11 // pred_fallthru
        _
      // Predicated region
      $region17: #{conformer_convolution.2} parent=11 // pred_check
        %p235 = pneg %p103
      $region18: #{conformer_convolution.2} parent=11 // pred_check_branch
        %237 = sbr.rel (%p235) target = $region20
      $region19: #{conformer_convolution.2} parent=11 // pred_region
        %s238 = smul.u32 2, %s22
        %p239 = scmp.lt.s32.totalorder %s238, 1
        %s240 = scalar_select %p239, %s238, 1
        %s241 = scalar_lea.vmem %s2, %s240
        %s242 = smul.u32 2, %s22
      $region20: #{conformer_convolution.2} parent=11 // pred_fallthru
        _
      // Predicated region
      $region21: #{conformer_convolution.2} parent=11 // pred_check
        %p243 = pneg %p129
      $region22: #{conformer_convolution.2} parent=11 // pred_check_branch
        %245 = sbr.rel (%p243) target = $region24
      $region23: #{conformer_convolution.2} parent=11 // pred_region
        %p246 = scmp.lt.s32.totalorder %s22, 0
        %s247 = scalar_select %p246, %s22, 0
        %s248 = smul.addr %s247, 8
        %s249 = scalar_lea.vmem %s3, %s248
      $region24: #{conformer_convolution.2} parent=11 // pred_fallthru
        _
      // Predicated region
      $region25: #{conformer_convolution.2} parent=11 // pred_check
        %p250 = pneg %p155
      $region26: #{conformer_convolution.2} parent=11 // pred_check_branch
        %252 = sbr.rel (%p250) target = $region28
      $region27: #{conformer_convolution.2} parent=11 // pred_region
        %p253 = scmp.lt.s32.totalorder %s22, 0
        %s254 = scalar_select %p253, %s22, 0
        %s255 = scalar_lea.vmem %s4, %s254
      $region28: #{conformer_convolution.2} parent=11 // pred_fallthru
        _
    $region12: #{conformer_convolution.2} parent=5 // pred_fallthru
      _
    %p256 = scmp.lt.s32.totalorder %s13, 2
    // Predicated region
    $region29: #{conformer_convolution.2} parent=5 // pred_check
      %p257 = pneg %p256
    $region30: #{conformer_convolution.2} parent=5 // pred_check_branch
      %259 = sbr.rel (%p257) target = $region32
    $region31: #{conformer_convolution.2} parent=5 // pred_region
      // Predicated region
      $region33: #{conformer_convolution.2} parent=31 // pred_check
        %p260 = pneg %p45
      $region34: #{conformer_convolution.2} parent=31 // pred_check_branch
        %262 = sbr.rel (%p260) target = $region36
      $region35: #{conformer_convolution.2} parent=31 // pred_region
        %p263 = scmp.lt.s32.totalorder %s21, 1
        %s264 = scalar_select %p263, %s21, 1
        %s265 = smul.addr %s264, 8
        %s266 = smul.addr %s265, 4
        %s267 = scalar_lea.vmem %s0, %s266
      $region36: #{conformer_convolution.2} parent=31 // pred_fallthru
        _
    $region32: #{conformer_convolution.2} parent=5 // pred_fallthru
      _
    %p268 = scmp.le.s32.totalorder 1, %s13
    %p269 = scmp.lt.s32.totalorder %s13, 3
    %p270 = pnand %p268, %p269
    %p271 = pneg %p270
    // Predicated region
    $region37: #{conformer_convolution.2} parent=5 // pred_check
      _
    $region38: #{conformer_convolution.2} parent=5 // pred_check_branch
      %273 = sbr.rel (%p270) target = $region40
    $region39: #{conformer_convolution.2} parent=5 // pred_region
      %s274 = ssub.s32 %s13, 1
      %p275 = scmp.lt.s32.totalorder %s23, 1
      %s276 = scalar_select %p275, %s23, 1
      %s277 = smul.addr %s276, 8
      %s278 = smul.addr %s277, 4
      %s279 = scalar_lea.vmem %s0, %s278
      %p280 = pneg %p51
      %p281 = pneg %p48
      %s282 = smul.u32 2, %s22
      %p283 = scmp.lt.s32.totalorder %s282, 1
      %s284 = scalar_select %p283, %s282, 1
      %s285 = smul.addr %s284, 4
      %s286 = scalar_lea.vmem %s1, %s285
      %p287 = pneg %p77
      %p288 = pneg %p74
      %s289 = smul.u32 2, %s22
      %p290 = scmp.lt.s32.totalorder %s289, 1
      %s291 = scalar_select %p290, %s289, 1
      %s292 = scalar_lea.vmem %s2, %s291
      %p293 = pneg %p103
      %p294 = pneg %p100
      %p295 = scmp.lt.s32.totalorder %s22, 0
      %s296 = scalar_select %p295, %s22, 0
      %s297 = smul.addr %s296, 8
      %s298 = scalar_lea.vmem %s3, %s297
      %p299 = pneg %p129
      %p300 = pneg %p126
      %p301 = scmp.lt.s32.totalorder %s22, 0
      %s302 = scalar_select %p301, %s22, 0
      %s303 = scalar_lea.vmem %s4, %s302
      %p304 = pneg %p155
      %p305 = pneg %p152
      %p306 = pneg %p183
      %p307 = pneg %p180
      %p308 = scmp.lt.s32.totalorder %s23, 1
      %s309 = scalar_select %p308, %s23, 1
      %p310 = scmp.lt.s32.totalorder %s22, 0
      %s311 = scalar_select %p310, %s22, 0
      %s312 = smul.addr %s309, 8
      %s313 = sadd.s32 %s311, %s312
      %s314 = smul.addr %s313, 8
      %s315 = scalar_lea.vmem %s5, %s314
      %p316 = pneg %p211
      %p317 = pneg %p208
      %p318 = scmp.lt.s32.totalorder %s23, 1
      %s319 = scalar_select %p318, %s23, 1
      %p320 = scmp.lt.s32.totalorder %s22, 0
      %s321 = scalar_select %p320, %s22, 0
      %s322 = sadd.s32 %s321, %s319
      %s323 = smul.addr %s322, 2
      %s324 = scalar_lea.vmem %s6, %s323
      %p325 = scmp.lt.s32.totalorder %s23, 1
      %s326 = scalar_select %p325, %s23, 1
      %s327 = smul.addr %s326, 8
      %s328 = smul.addr %s327, 4
      %s329 = scalar_lea.vmem %s0, %s328
      %s330 = smul.u32 2, %s22
      %p331 = scmp.lt.s32.totalorder %s330, 1
      %s332 = scalar_select %p331, %s330, 1
      %s333 = smul.addr %s332, 4
      %s334 = scalar_lea.vmem %s1, %s333
      %s335 = smul.u32 2, %s22
      %s336 = smul.u32 2, %s22
      %p337 = scmp.lt.s32.totalorder %s336, 1
      %s338 = scalar_select %p337, %s336, 1
      %s339 = scalar_lea.vmem %s2, %s338
      %s340 = smul.u32 2, %s22
      %p341 = scmp.lt.s32.totalorder %s22, 0
      %s342 = scalar_select %p341, %s22, 0
      %s343 = smul.addr %s342, 8
      %s344 = scalar_lea.vmem %s3, %s343
      %p345 = scmp.lt.s32.totalorder %s22, 0
      %s346 = scalar_select %p345, %s22, 0
      %s347 = scalar_lea.vmem %s4, %s346
      %p348 = scmp.lt.s32.totalorder %s23, 1
      %s349 = scalar_select %p348, %s23, 1
      %p350 = scmp.lt.s32.totalorder %s22, 0
      %s351 = scalar_select %p350, %s22, 0
      %s352 = smul.addr %s349, 8
      %s353 = sadd.s32 %s351, %s352
      %s354 = smul.addr %s353, 8
      %s355 = scalar_lea.vmem %s5, %s354
      %p356 = scmp.lt.s32.totalorder %s23, 1
      %s357 = scalar_select %p356, %s23, 1
      %p358 = scmp.lt.s32.totalorder %s22, 0
      %s359 = scalar_select %p358, %s22, 0
      %s360 = sadd.s32 %s359, %s357
      %s361 = smul.addr %s360, 2
      %s362 = scalar_lea.vmem %s6, %s361
      %364 = vst [vmem:[#allocation2] sm:$0xff] 0.0
      %365 = vst [vmem:[#allocation2 + $0x48] sm:$0xff] 0.0
      %v366 = vld [vmem:[%s329] sm:$0xf]
      %v367 = vld [vmem:[%s329 + $0x4] sm:$0xf]
      %v368 = vld [vmem:[%s329 + $0x8] sm:$0xf]
      %v369 = vld [vmem:[%s329 + $0xc] sm:$0xf]
      %v370 = vld [vmem:[%s329 + $0x10] sm:$0xf]
      %v371 = vld [vmem:[%s329 + $0x14] sm:$0xf]
      %v372 = vld [vmem:[%s329 + $0x18] sm:$0xf]
      %v373 = vld [vmem:[%s329 + $0x1c] sm:$0xf]
      %v374 = vld [vmem:[%s334] sm:$0xff]
      %v375 = vld [vmem:[%s334 + $0x8] sm:$0xff]
      %v376 = vld [vmem:[%s334 + $0x10] sm:$0xff]
      %v377 = vld [vmem:[%s334 + $0x18] sm:$0xff]
      %v378 = vld [vmem:[%s334 + $0x20] sm:$0xff]
      %v379 = vld [vmem:[%s334 + $0x28] sm:$0xff]
      %v380 = vld [vmem:[%s334 + $0x30] sm:$0xff]
      %v381 = vld [vmem:[%s334 + $0x38] sm:$0xff]
      %v382 = vld [vmem:[%s334 + $0x40] sm:$0xff]
      %v383 = vld [vmem:[%s334 + $0x48] sm:$0xff]
      %v384 = vld [vmem:[%s334 + $0x50] sm:$0xff]
      %v385 = vld [vmem:[%s334 + $0x58] sm:$0xff]
      %v386 = vld [vmem:[%s334 + $0x60] sm:$0xff]
      %v387 = vld [vmem:[%s334 + $0x68] sm:$0xff]
      %v388 = vld [vmem:[%s334 + $0x70] sm:$0xff]
      %v389 = vld [vmem:[%s334 + $0x78] sm:$0xff]
      %v390 = vld [vmem:[%s339] sm:$0x3]
      %v392 = vlaneseq
      %v393 = vshrl.u32 %v392, 7
      %v394 = vsub.s32 0, %v393
      %v395 = vrot.slane %v390, %v394
      %v396 = vlaneseq
      %v397 = vshrl.u32 %v396, 7
      %v398 = vsub.s32 1, %v397
      %v399 = vrot.slane %v390, %v398
      %v410 = vunpack.c.l.b16 %v366
      %v411 = vunpack.c.l.b16 %v367
      %v412 = vunpack.c.l.b16 %v368
      %v413 = vunpack.c.l.b16 %v369
      %v414 = vunpack.c.l.b16 %v370
      %v415 = vunpack.c.l.b16 %v371
      %v416 = vunpack.c.l.b16 %v372
      %v417 = vunpack.c.l.b16 %v373
      %v418 = vpack.c.b16 %v411, %v410
      %v419 = vpack.c.b16 %v413, %v412
      %v420 = vpack.c.b16 %v415, %v414
      %v421 = vpack.c.b16 %v417, %v416
      %v442 = vunpack.c.l.b16 %v374
      %v443 = vunpack.c.h.b16 %v374
      %v444 = vunpack.c.l.b16 %v375
      %v445 = vunpack.c.h.b16 %v375
      %v446 = vunpack.c.l.b16 %v376
      %v447 = vunpack.c.h.b16 %v376
      %v448 = vunpack.c.l.b16 %v377
      %v449 = vunpack.c.h.b16 %v377
      %v450 = vunpack.c.l.b16 %v378
      %v451 = vunpack.c.h.b16 %v378
      %v452 = vunpack.c.l.b16 %v379
      %v453 = vunpack.c.h.b16 %v379
      %v454 = vunpack.c.l.b16 %v380
      %v455 = vunpack.c.h.b16 %v380
      %v456 = vunpack.c.l.b16 %v381
      %v457 = vunpack.c.h.b16 %v381
      %v458 = vunpack.c.l.b16 %v382
      %v459 = vunpack.c.h.b16 %v382
      %v460 = vunpack.c.l.b16 %v383
      %v461 = vunpack.c.h.b16 %v383
      %v462 = vunpack.c.l.b16 %v384
      %v463 = vunpack.c.h.b16 %v384
      %v464 = vunpack.c.l.b16 %v385
      %v465 = vunpack.c.h.b16 %v385
      %v466 = vunpack.c.l.b16 %v386
      %v467 = vunpack.c.h.b16 %v386
      %v468 = vunpack.c.l.b16 %v387
      %v469 = vunpack.c.h.b16 %v387
      %v470 = vunpack.c.l.b16 %v388
      %v471 = vunpack.c.h.b16 %v388
      %v472 = vunpack.c.l.b16 %v389
      %v473 = vunpack.c.h.b16 %v389
      %v474 = vpack.c.b16 %v444, %v442
      %v475 = vpack.c.b16 %v445, %v443
      %v476 = vpack.c.b16 %v448, %v446
      %v477 = vpack.c.b16 %v449, %v447
      %v478 = vpack.c.b16 %v452, %v450
      %v479 = vpack.c.b16 %v453, %v451
      %v480 = vpack.c.b16 %v456, %v454
      %v481 = vpack.c.b16 %v457, %v455
      %v482 = vpack.c.b16 %v460, %v458
      %v483 = vpack.c.b16 %v461, %v459
      %v484 = vpack.c.b16 %v464, %v462
      %v485 = vpack.c.b16 %v465, %v463
      %v486 = vpack.c.b16 %v468, %v466
      %v487 = vpack.c.b16 %v469, %v467
      %v488 = vpack.c.b16 %v472, %v470
      %v489 = vpack.c.b16 %v473, %v471
      %506 = vmatprep.subr.bf16.mxu0 %v475
      %507 = vmatpush1.bf16.msra.mxu0 %v474
      %508 = vmatprep.subr.bf16.mxu0 %v477
      %509 = vmatpush1.bf16.msra.mxu0 %v476
      %510 = vmatprep.subr.bf16.mxu0 %v479
      %511 = vmatpush1.bf16.msra.mxu0 %v478
      %512 = vmatprep.subr.bf16.mxu0 %v481
      %513 = vmatpush1.bf16.msra.mxu0 %v480
      %514 = vmatprep.subr.bf16.mxu0 %v483
      %515 = vmatpush1.bf16.msra.mxu0 %v482
      %516 = vmatprep.subr.bf16.mxu0 %v485
      %517 = vmatpush1.bf16.msra.mxu0 %v484
      %518 = vmatprep.subr.bf16.mxu0 %v487
      %519 = vmatpush1.bf16.msra.mxu0 %v486
      %520 = vmatprep.subr.bf16.mxu0 %v489
      %521 = vmatpush1.bf16.msra.mxu0 %v488
      %522 = vmatprep.subr.bf16.mxu0 0
      %523 = vmatpush1.bf16.msra.mxu0 0
      %524 = vmatprep.subr.bf16.mxu0 0
      %525 = vmatpush1.bf16.msra.mxu0 0
      %526 = vmatprep.subr.bf16.mxu0 0
      %527 = vmatpush1.bf16.msra.mxu0 0
      %528 = vmatprep.subr.bf16.mxu0 0
      %529 = vmatpush1.bf16.msra.mxu0 0
      %530 = vmatprep.subr.bf16.mxu0 0
      %531 = vmatpush1.bf16.msra.mxu0 0
      %532 = vmatprep.subr.bf16.mxu0 0
      %533 = vmatpush1.bf16.msra.mxu0 0
      %534 = vmatprep.subr.bf16.mxu0 0
      %535 = vmatpush1.bf16.msra.mxu0 0
      %536 = vmatprep.subr.bf16.mxu0 0
      %537 = vmatpush1.bf16.msra.mxu0 0
      %538 = vmatprep.mubr.bf16.mxu0 0
      %539 = vmatmul.mubr.bf16.gmra.mrb[0].mxu0 %v418
      %v540 = vpop.f32.mrb[0].mxu0
      %v541 = vadd.f32 %v395, %v540
      %v542 = vpop.f32.mrb[0].mxu0
      %v543 = vadd.f32 %v399, %v542
      %v544 = vpop.f32.mrb[0].mxu0
      %v545 = vadd.f32 %v395, %v544
      %v546 = vpop.f32.mrb[0].mxu0
      %v547 = vadd.f32 %v399, %v546
      %548 = vmatprep.mubr.bf16.mxu0 0
      %549 = vmatmul.mubr.bf16.gmra.mrb[0].mxu0 %v419
      %v550 = vpop.f32.mrb[0].mxu0
      %v551 = vadd.f32 %v395, %v550
      %v552 = vpop.f32.mrb[0].mxu0
      %v553 = vadd.f32 %v399, %v552
      %v554 = vpop.f32.mrb[0].mxu0
      %v555 = vadd.f32 %v395, %v554
      %v556 = vpop.f32.mrb[0].mxu0
      %v557 = vadd.f32 %v399, %v556
      %558 = vmatprep.mubr.bf16.mxu0 0
      %559 = vmatmul.mubr.bf16.gmra.mrb[0].mxu0 %v420
      %v560 = vpop.f32.mrb[0].mxu0
      %v561 = vadd.f32 %v395, %v560
      %v562 = vpop.f32.mrb[0].mxu0
      %v563 = vadd.f32 %v399, %v562
      %v564 = vpop.f32.mrb[0].mxu0
      %v565 = vadd.f32 %v395, %v564
      %v566 = vpop.f32.mrb[0].mxu0
      %v567 = vadd.f32 %v399, %v566
      %568 = vmatprep.mubr.bf16.mxu0 0
      %569 = vmatmul.mubr.bf16.gmra.mrb[0].mxu0 %v421
      %v570 = vpop.f32.mrb[0].mxu0
      %v571 = vadd.f32 %v395, %v570
      %v572 = vpop.f32.mrb[0].mxu0
      %v573 = vadd.f32 %v399, %v572
      %v574 = vpop.f32.mrb[0].mxu0
      %v575 = vadd.f32 %v395, %v574
      %v576 = vpop.f32.mrb[0].mxu0
      %v577 = vadd.f32 %v399, %v576
      %578 = vdwg.mxu0
      %v579 = vxor.u32 %v543, 2147483648
      %v580 = vxor.u32 %v547, 2147483648
      %v581 = vxor.u32 %v553, 2147483648
      %v582 = vxor.u32 %v557, 2147483648
      %v583 = vxor.u32 %v563, 2147483648
      %v584 = vxor.u32 %v567, 2147483648
      %v585 = vxor.u32 %v573, 2147483648
      %v586 = vxor.u32 %v577, 2147483648
      %v587 = vmul.f32 %v579, 1.442695
      %v588 = vpow.pop %v587
      %v589 = vmul.f32 %v580, 1.442695
      %v590 = vpow.pop %v589
      %v591 = vmul.f32 %v581, 1.442695
      %v592 = vpow.pop %v591
      %v593 = vmul.f32 %v582, 1.442695
      %v594 = vpow.pop %v593
      %v595 = vmul.f32 %v583, 1.442695
      %v596 = vpow.pop %v595
      %v597 = vmul.f32 %v584, 1.442695
      %v598 = vpow.pop %v597
      %v599 = vmul.f32 %v585, 1.442695
      %v600 = vpow.pop %v599
      %v601 = vmul.f32 %v586, 1.442695
      %v602 = vpow.pop %v601
      %v603 = vadd.f32 %v588, 1.0
      %v604 = vadd.f32 %v590, 1.0
      %v605 = vadd.f32 %v592, 1.0
      %v606 = vadd.f32 %v594, 1.0
      %v607 = vadd.f32 %v596, 1.0
      %v608 = vadd.f32 %v598, 1.0
      %v609 = vadd.f32 %v600, 1.0
      %v610 = vadd.f32 %v602, 1.0
      %v611 = vrcp.pop %v603
      %v612 = vmul.f32 1.0, %v611
      %v613 = vrcp.pop %v604
      %v614 = vmul.f32 1.0, %v613
      %v615 = vrcp.pop %v605
      %v616 = vmul.f32 1.0, %v615
      %v617 = vrcp.pop %v606
      %v618 = vmul.f32 1.0, %v617
      %v619 = vrcp.pop %v607
      %v620 = vmul.f32 1.0, %v619
      %v621 = vrcp.pop %v608
      %v622 = vmul.f32 1.0, %v621
      %v623 = vrcp.pop %v609
      %v624 = vmul.f32 1.0, %v623
      %v625 = vrcp.pop %v610
      %v626 = vmul.f32 1.0, %v625
      %v627 = vmul.f32 %v541, %v612
      %v628 = vmul.f32 %v545, %v614
      %v629 = vmul.f32 %v551, %v616
      %v630 = vmul.f32 %v555, %v618
      %v631 = vmul.f32 %v561, %v620
      %v632 = vmul.f32 %v565, %v622
      %v633 = vmul.f32 %v571, %v624
      %v634 = vmul.f32 %v575, %v626
      %635 = vst [vmem:[#allocation2 + $0x8] sm:$0xff] %v627
      %636 = vst [vmem:[#allocation2 + $0x10] sm:$0xff] %v628
      %637 = vst [vmem:[#allocation2 + $0x18] sm:$0xff] %v629
      %638 = vst [vmem:[#allocation2 + $0x20] sm:$0xff] %v630
      %639 = vst [vmem:[#allocation2 + $0x28] sm:$0xff] %v631
      %640 = vst [vmem:[#allocation2 + $0x30] sm:$0xff] %v632
      %641 = vst [vmem:[#allocation2 + $0x38] sm:$0xff] %v633
      %642 = vst [vmem:[#allocation2 + $0x40] sm:$0xff] %v634
      %v643 = vld [vmem:[#allocation2 + $0x6] sm:$0xff]
      %v644 = vld [vmem:[#allocation2 + $0xe] sm:$0xff]
      %v645 = vld [vmem:[#allocation2 + $0x16] sm:$0xff]
      %v646 = vld [vmem:[#allocation2 + $0x1e] sm:$0xff]
      %v647 = vld [vmem:[#allocation2 + $0x26] sm:$0xff]
      %v648 = vld [vmem:[#allocation2 + $0x2e] sm:$0xff]
      %v649 = vld [vmem:[#allocation2 + $0x36] sm:$0xff]
      %v650 = vld [vmem:[#allocation2 + $0x3e] sm:$0xff]
      %v651 = vld [vmem:[%s344] sm:$0x1]
      %v652 = vlaneseq
      %v653 = vshrl.u32 %v652, 7
      %v654 = vsub.s32 0, %v653
      %v655 = vrot.slane %v651, %v654
      %v656 = vmul.f32 %v643, %v655
      %v657 = vmul.f32 %v644, %v655
      %v658 = vmul.f32 %v645, %v655
      %v659 = vmul.f32 %v646, %v655
      %v660 = vmul.f32 %v647, %v655
      %v661 = vmul.f32 %v648, %v655
      %v662 = vmul.f32 %v649, %v655
      %v663 = vmul.f32 %v650, %v655
      %v664 = vadd.f32 %v656, 0.0
      %v665 = vadd.f32 %v657, 0.0
      %v666 = vadd.f32 %v658, 0.0
      %v667 = vadd.f32 %v659, 0.0
      %v668 = vadd.f32 %v660, 0.0
      %v669 = vadd.f32 %v661, 0.0
      %v670 = vadd.f32 %v662, 0.0
      %v671 = vadd.f32 %v663, 0.0
      %v672 = vld [vmem:[#allocation2 + $0x7] sm:$0xff]
      %v673 = vld [vmem:[#allocation2 + $0xf] sm:$0xff]
      %v674 = vld [vmem:[#allocation2 + $0x17] sm:$0xff]
      %v675 = vld [vmem:[#allocation2 + $0x1f] sm:$0xff]
      %v676 = vld [vmem:[#allocation2 + $0x27] sm:$0xff]
      %v677 = vld [vmem:[#allocation2 + $0x2f] sm:$0xff]
      %v678 = vld [vmem:[#allocation2 + $0x37] sm:$0xff]
      %v679 = vld [vmem:[#allocation2 + $0x3f] sm:$0xff]
      %v680 = vld [vmem:[%s344 + $0x1] sm:$0x1]
      %v681 = vlaneseq
      %v682 = vshrl.u32 %v681, 7
      %v683 = vsub.s32 0, %v682
      %v684 = vrot.slane %v680, %v683
      %v685 = vmul.f32 %v672, %v684
      %v686 = vmul.f32 %v673, %v684
      %v687 = vmul.f32 %v674, %v684
      %v688 = vmul.f32 %v675, %v684
      %v689 = vmul.f32 %v676, %v684
      %v690 = vmul.f32 %v677, %v684
      %v691 = vmul.f32 %v678, %v684
      %v692 = vmul.f32 %v679, %v684
      %v693 = vadd.f32 %v664, %v685
      %v694 = vadd.f32 %v665, %v686
      %v695 = vadd.f32 %v666, %v687
      %v696 = vadd.f32 %v667, %v688
      %v697 = vadd.f32 %v668, %v689
      %v698 = vadd.f32 %v669, %v690
      %v699 = vadd.f32 %v670, %v691
      %v700 = vadd.f32 %v671, %v692
      %v701 = vld [vmem:[#allocation2 + $0x8] sm:$0xff]
      %v702 = vld [vmem:[#allocation2 + $0x10] sm:$0xff]
      %v703 = vld [vmem:[#allocation2 + $0x18] sm:$0xff]
      %v704 = vld [vmem:[#allocation2 + $0x20] sm:$0xff]
      %v705 = vld [vmem:[#allocation2 + $0x28] sm:$0xff]
      %v706 = vld [vmem:[#allocation2 + $0x30] sm:$0xff]
      %v707 = vld [vmem:[#allocation2 + $0x38] sm:$0xff]
      %v708 = vld [vmem:[#allocation2 + $0x40] sm:$0xff]
      %v709 = vld [vmem:[%s344 + $0x2] sm:$0x1]
      %v710 = vlaneseq
      %v711 = vshrl.u32 %v710, 7
      %v712 = vsub.s32 0, %v711
      %v713 = vrot.slane %v709, %v712
      %v714 = vmul.f32 %v701, %v713
      %v715 = vmul.f32 %v702, %v713
      %v716 = vmul.f32 %v703, %v713
      %v717 = vmul.f32 %v704, %v713
      %v718 = vmul.f32 %v705, %v713
      %v719 = vmul.f32 %v706, %v713
      %v720 = vmul.f32 %v707, %v713
      %v721 = vmul.f32 %v708, %v713
      %v722 = vadd.f32 %v693, %v714
      %v723 = vadd.f32 %v694, %v715
      %v724 = vadd.f32 %v695, %v716
      %v725 = vadd.f32 %v696, %v717
      %v726 = vadd.f32 %v697, %v718
      %v727 = vadd.f32 %v698, %v719
      %v728 = vadd.f32 %v699, %v720
      %v729 = vadd.f32 %v700, %v721
      %v730 = vld [vmem:[#allocation2 + $0x9] sm:$0xff]
      %v731 = vld [vmem:[#allocation2 + $0x11] sm:$0xff]
      %v732 = vld [vmem:[#allocation2 + $0x19] sm:$0xff]
      %v733 = vld [vmem:[#allocation2 + $0x21] sm:$0xff]
      %v734 = vld [vmem:[#allocation2 + $0x29] sm:$0xff]
      %v735 = vld [vmem:[#allocation2 + $0x31] sm:$0xff]
      %v736 = vld [vmem:[#allocation2 + $0x39] sm:$0xff]
      %v737 = vld [vmem:[#allocation2 + $0x41] sm:$0xff]
      %v738 = vld [vmem:[%s344 + $0x3] sm:$0x1]
      %v739 = vlaneseq
      %v740 = vshrl.u32 %v739, 7
      %v741 = vsub.s32 0, %v740
      %v742 = vrot.slane %v738, %v741
      %v743 = vmul.f32 %v730, %v742
      %v744 = vmul.f32 %v731, %v742
      %v745 = vmul.f32 %v732, %v742
      %v746 = vmul.f32 %v733, %v742
      %v747 = vmul.f32 %v734, %v742
      %v748 = vmul.f32 %v735, %v742
      %v749 = vmul.f32 %v736, %v742
      %v750 = vmul.f32 %v737, %v742
      %v751 = vadd.f32 %v722, %v743
      %v752 = vadd.f32 %v723, %v744
      %v753 = vadd.f32 %v724, %v745
      %v754 = vadd.f32 %v725, %v746
      %v755 = vadd.f32 %v726, %v747
      %v756 = vadd.f32 %v727, %v748
      %v757 = vadd.f32 %v728, %v749
      %v758 = vadd.f32 %v729, %v750
      %v759 = vld [vmem:[#allocation2 + $0xa] sm:$0xff]
      %v760 = vld [vmem:[#allocation2 + $0x12] sm:$0xff]
      %v761 = vld [vmem:[#allocation2 + $0x1a] sm:$0xff]
      %v762 = vld [vmem:[#allocation2 + $0x22] sm:$0xff]
      %v763 = vld [vmem:[#allocation2 + $0x2a] sm:$0xff]
      %v764 = vld [vmem:[#allocation2 + $0x32] sm:$0xff]
      %v765 = vld [vmem:[#allocation2 + $0x3a] sm:$0xff]
      %v766 = vld [vmem:[#allocation2 + $0x42] sm:$0xff]
      %v767 = vld [vmem:[%s344 + $0x4] sm:$0x1]
      %v768 = vlaneseq
      %v769 = vshrl.u32 %v768, 7
      %v770 = vsub.s32 0, %v769
      %v771 = vrot.slane %v767, %v770
      %v772 = vmul.f32 %v759, %v771
      %v773 = vmul.f32 %v760, %v771
      %v774 = vmul.f32 %v761, %v771
      %v775 = vmul.f32 %v762, %v771
      %v776 = vmul.f32 %v763, %v771
      %v777 = vmul.f32 %v764, %v771
      %v778 = vmul.f32 %v765, %v771
      %v779 = vmul.f32 %v766, %v771
      %v780 = vadd.f32 %v751, %v772
      %v781 = vadd.f32 %v752, %v773
      %v782 = vadd.f32 %v753, %v774
      %v783 = vadd.f32 %v754, %v775
      %v784 = vadd.f32 %v755, %v776
      %v785 = vadd.f32 %v756, %v777
      %v786 = vadd.f32 %v757, %v778
      %v787 = vadd.f32 %v758, %v779
      %v788 = vld [vmem:[%s347] sm:$0x1]
      %v790 = vlaneseq
      %v791 = vshrl.u32 %v790, 7
      %v792 = vsub.s32 0, %v791
      %v793 = vrot.slane %v788, %v792
      %v795 = vadd.f32 %v780, %v793
      %v796 = vadd.f32 %v781, %v793
      %v797 = vadd.f32 %v782, %v793
      %v798 = vadd.f32 %v783, %v793
      %v799 = vadd.f32 %v784, %v793
      %v800 = vadd.f32 %v785, %v793
      %v801 = vadd.f32 %v786, %v793
      %v802 = vadd.f32 %v787, %v793
      %803 = vst [vmem:[%s355] sm:$0xff] %v795
      %804 = vst [vmem:[%s355 + $0x8] sm:$0xff] %v796
      %805 = vst [vmem:[%s355 + $0x10] sm:$0xff] %v797
      %806 = vst [vmem:[%s355 + $0x18] sm:$0xff] %v798
      %807 = vst [vmem:[%s355 + $0x20] sm:$0xff] %v799
      %808 = vst [vmem:[%s355 + $0x28] sm:$0xff] %v800
      %809 = vst [vmem:[%s355 + $0x30] sm:$0xff] %v801
      %810 = vst [vmem:[%s355 + $0x38] sm:$0xff] %v802
      %v811 = vadd.f32 %v795, %v796
      %v812 = vadd.f32 %v811, %v797
      %v813 = vadd.f32 %v812, %v798
      %v814 = vadd.f32 %v813, %v799
      %v815 = vadd.f32 %v814, %v800
      %v816 = vadd.f32 %v815, %v801
      %v817 = vadd.f32 %v816, %v802
      %v818 = vrot.slane %v817, 4
      %v819 = vadd.f32 %v817, %v818
      %v820 = vrot.slane %v819, 2
      %v821 = vadd.f32 %v819, %v820
      %v822 = vrot.slane %v821, 1
      %v823 = vadd.f32 %v821, %v822
      %v824 = vadd.f32 %v823, 0.0
      %v825 = vmul.f32 %v795, %v795
      %v826 = vmul.f32 %v796, %v796
      %v827 = vmul.f32 %v797, %v797
      %v828 = vmul.f32 %v798, %v798
      %v829 = vmul.f32 %v799, %v799
      %v830 = vmul.f32 %v800, %v800
      %v831 = vmul.f32 %v801, %v801
      %v832 = vmul.f32 %v802, %v802
      %v833 = vadd.f32 %v825, %v826
      %v834 = vadd.f32 %v833, %v827
      %v835 = vadd.f32 %v834, %v828
      %v836 = vadd.f32 %v835, %v829
      %v837 = vadd.f32 %v836, %v830
      %v838 = vadd.f32 %v837, %v831
      %v839 = vadd.f32 %v838, %v832
      %v840 = vrot.slane %v839, 4
      %v841 = vadd.f32 %v839, %v840
      %v842 = vrot.slane %v841, 2
      %v843 = vadd.f32 %v841, %v842
      %v844 = vrot.slane %v843, 1
      %v845 = vadd.f32 %v843, %v844
      %v846 = vadd.f32 %v845, 0.0
      %vm847 = vcmask 1040384
      %v848 = vsel %vm847, %v824, %v846
      %849 = vst [vmem:[%s362] sm:$0x3] %v848
      %p850 = scmp.lt.s32.totalorder %s23, 1
      %s851 = scalar_select %p850, %s23, 1
      %p852 = scmp.lt.s32.totalorder %s22, 0
      %s853 = scalar_select %p852, %s22, 0
      %s854 = smul.addr %s851, 8
      %s855 = sadd.s32 %s853, %s854
      %s856 = smul.addr %s855, 8
      %s857 = scalar_lea.vmem %s5, %s856
      %p858 = scmp.lt.s32.totalorder %s23, 1
      %s859 = scalar_select %p858, %s23, 1
      %p860 = scmp.lt.s32.totalorder %s22, 0
      %s861 = scalar_select %p860, %s22, 0
      %s862 = sadd.s32 %s861, %s859
      %s863 = smul.addr %s862, 2
      %s864 = scalar_lea.vmem %s6, %s863
      // Predicated region
      $region41: #{conformer_convolution.2} parent=39 // pred_check
        %p865 = pneg %p180
      $region42: #{conformer_convolution.2} parent=39 // pred_check_branch
        %867 = sbr.rel (%p865) target = $region44
      $region43: #{conformer_convolution.2} parent=39 // pred_region
        _
      $region44: #{conformer_convolution.2} parent=39 // pred_fallthru
        _
      // Predicated region
      $region45: #{conformer_convolution.2} parent=39 // pred_check
        %p868 = pneg %p208
      $region46: #{conformer_convolution.2} parent=39 // pred_check_branch
        %870 = sbr.rel (%p868) target = $region48
      $region47: #{conformer_convolution.2} parent=39 // pred_region
        _
      $region48: #{conformer_convolution.2} parent=39 // pred_fallthru
        _
    $region40: #{conformer_convolution.2} parent=5 // pred_fallthru
      _
    %p871 = scmp.le.s32.totalorder 2, %s13
    // Predicated region
    $region49: #{conformer_convolution.2} parent=5 // pred_check
      %p872 = pneg %p871
    $region50: #{conformer_convolution.2} parent=5 // pred_check_branch
      %874 = sbr.rel (%p872) target = $region52
    $region51: #{conformer_convolution.2} parent=5 // pred_region
      %s875 = ssub.s32 %s13, 2
      // Predicated region
      $region53: #{conformer_convolution.2} parent=51 // pred_check
        %p876 = pneg %p186
      $region54: #{conformer_convolution.2} parent=51 // pred_check_branch
        %878 = sbr.rel (%p876) target = $region56
      $region55: #{conformer_convolution.2} parent=51 // pred_region
        %p879 = scmp.lt.s32.totalorder %s25, 1
        %s880 = scalar_select %p879, %s25, 1
        %p881 = scmp.lt.s32.totalorder %s24, 0
        %s882 = scalar_select %p881, %s24, 0
        %s883 = smul.addr %s880, 8
        %s884 = sadd.s32 %s882, %s883
        %s885 = smul.addr %s884, 8
        %s886 = scalar_lea.vmem %s5, %s885
      $region56: #{conformer_convolution.2} parent=51 // pred_fallthru
        _
      // Predicated region
      $region57: #{conformer_convolution.2} parent=51 // pred_check
        %p887 = pneg %p214
      $region58: #{conformer_convolution.2} parent=51 // pred_check_branch
        %889 = sbr.rel (%p887) target = $region60
      $region59: #{conformer_convolution.2} parent=51 // pred_region
        %p890 = scmp.lt.s32.totalorder %s25, 1
        %s891 = scalar_select %p890, %s25, 1
        %p892 = scmp.lt.s32.totalorder %s24, 0
        %s893 = scalar_select %p892, %s24, 0
        %s894 = sadd.s32 %s893, %s891
        %s895 = smul.addr %s894, 2
        %s896 = scalar_lea.vmem %s6, %s895
      $region60: #{conformer_convolution.2} parent=51 // pred_fallthru
        _
    $region52: #{conformer_convolution.2} parent=5 // pred_fallthru
      _
  $region6: #{conformer_convolution.2} parent=0 // loop_footer
    %s17 = sadd.s32 1, %s13
  $region7: #{conformer_convolution.2} parent=0 // loop_footer_branch
    %12 = sbr.rel target = $region3
  $region8: #{conformer_convolution.2} parent=0 // loop_exit
    _

</llo_original>
